<compile_context>
chip_gen: v7x
topology: tpu7x:2x2x1
jax: 0.10.0
libtpu: 0.0.40
codegen_flags: <defaults>
</compile_context>

<pallas_src>
import functools
import jax
import jax.numpy as jnp
from jax.experimental import pallas as pl
from jax.experimental.pallas import tpu as pltpu


def _layernorm(x, gamma, beta, eps=1e-5):
    mean = jnp.mean(x, axis=-1, keepdims=True)
    var = jnp.mean((x - mean) ** 2, axis=-1, keepdims=True)
    return (x - mean) * jax.lax.rsqrt(var + eps) * gamma + beta


# ---------------------------------------------------------------------------
# Kernel 1: LayerNorm1 + multi-head self-attention + output proj + residual
# ---------------------------------------------------------------------------
def attn_kernel(x_ref, ln_g_ref, ln_b_ref, wq_ref, wkv_ref, wproj_ref, bproj_ref,
                o_ref, acc_ref, *, num_heads, scale):
    x = x_ref[0].astype(jnp.float32)                      # (N, C)
    C = x.shape[-1]
    hd = C // num_heads

    xn = _layernorm(x, ln_g_ref[0], ln_b_ref[0])
    xn_b = xn.astype(jnp.bfloat16)                        # bf16 MXU inputs, f32 accum

    # scale folded into q once (saves num_heads * N^2 VPU multiplies)
    q = jnp.dot(xn_b, wq_ref[...], preferred_element_type=jnp.float32) * scale   # (N, C)
    kv = jnp.dot(xn_b, wkv_ref[...], preferred_element_type=jnp.float32)         # (N, 2C)

    for h in range(num_heads):
        sl = slice(h * hd, (h + 1) * hd)
        qh = q[:, sl].astype(jnp.bfloat16)                # (N, hd)
        kh = kv[:, sl].astype(jnp.bfloat16)               # (N, hd)
        vh = kv[:, C + h * hd: C + (h + 1) * hd].astype(jnp.bfloat16)
        # q @ k^T (contract over head dim, no explicit transpose)
        s = jax.lax.dot_general(qh, kh, (((1,), (1,)), ((), ())),
                                preferred_element_type=jnp.float32)    # (N, N) f32
        s = s - jnp.max(s, axis=-1, keepdims=True)
        p = jnp.exp(s)
        p = p * pl.reciprocal(jnp.sum(p, axis=-1, keepdims=True), approx=True)
        # write head output into preallocated scratch (no lane-wise concat)
        acc_ref[:, sl] = jnp.dot(p.astype(jnp.bfloat16), vh,
                                 preferred_element_type=jnp.float32)

    ao = acc_ref[...].astype(jnp.bfloat16)                # (N, C)
    y = jnp.dot(ao, wproj_ref[...],
                preferred_element_type=jnp.float32) + bproj_ref[0]
    o_ref[0] = (x + y).astype(o_ref.dtype)


# ---------------------------------------------------------------------------
# Kernel 2 (fully fused MLP half):
#   LayerNorm2 + fc1 + depthwise 3x3 conv (pad=1, groups=Chid) + GELU + fc2 + residual
# The hidden (N, Chid) tensor lives only in VMEM / vregs; the 3x3 conv is done as
# row-shifted adds on the flattened (H*W, Chid) layout with zero-fill shifts for the
# H border and precomputed column masks for the W border (no HBM pad, no reshape).
# ---------------------------------------------------------------------------
def mlp_kernel(x_ref, ln_g_ref, ln_b_ref, w1_ref, b1_ref, wdw_ref, bdw_ref,
               w2_ref, b2_ref, ml_ref, mr_ref, o_ref, *, W):
    x = x_ref[0].astype(jnp.float32)                      # (N, C), N = H*W
    xn = _layernorm(x, ln_g_ref[0], ln_b_ref[0])

    h1 = jnp.dot(xn.astype(jnp.bfloat16), w1_ref[...],
                 preferred_element_type=jnp.float32) + b1_ref[0]       # (N, Chid) f32
    chid = h1.shape[-1]

    ml = ml_ref[...]                                      # (N, 1): valid when col >= 1
    mr = mr_ref[...]                                      # (N, 1): valid when col <= W-2

    def shift(xv, s):
        # out[n] = xv[n + s], zero-filled outside [0, N)
        if s == 0:
            return xv
        z = jnp.zeros((abs(s), chid), xv.dtype)
        if s > 0:
            return jnp.concatenate([xv[s:], z], axis=0)
        return jnp.concatenate([z, xv[:s]], axis=0)

    acc = jnp.zeros_like(h1)
    for di in range(3):
        for dj in range(3):
            s = (di - 1) * W + (dj - 1)
            tap = shift(h1, s)
            if dj == 2:        # reads column j+1 -> invalid at right edge
                tap = tap * mr
            elif dj == 0:      # reads column j-1 -> invalid at left edge
                tap = tap * ml
            acc = acc + tap * wdw_ref[di * 3 + dj, :]
    acc = acc + bdw_ref[0]

    # exact GELU (matches nn.GELU default, erf form)
    g = 0.5 * acc * (1.0 + jax.lax.erf(acc * jnp.float32(0.7071067811865476)))

    y = jnp.dot(g.astype(jnp.bfloat16), w2_ref[...],
                preferred_element_type=jnp.float32) + b2_ref[0]
    o_ref[0] = (x + y).astype(o_ref.dtype)


# ---------------------------------------------------------------------------
# Wrapper
# ---------------------------------------------------------------------------
def block_forward(x, H, W, p, num_heads):
    B, N, C = x.shape
    assert N == H * W
    hd = C // num_heads
    scale = float(hd) ** -0.5
    Chid = p["w1"].shape[1]

    wfull = lambda shape: pl.BlockSpec(shape, lambda b: tuple(0 for _ in shape))
    cparams = pltpu.CompilerParams(
        dimension_semantics=("parallel",),            # shard batch over v7x's 2 TCs
        vmem_limit_bytes=64 * 1024 * 1024,
    )

    # --- LN1 + attention + proj + residual ---
    x1 = pl.pallas_call(
        functools.partial(attn_kernel, num_heads=num_heads, scale=scale),
        out_shape=jax.ShapeDtypeStruct((B, N, C), x.dtype),
        grid=(B,),
        in_specs=[
            pl.BlockSpec((1, N, C), lambda b: (b, 0, 0)),
            wfull((1, C)), wfull((1, C)),
            wfull((C, C)), wfull((C, 2 * C)), wfull((C, C)), wfull((1, C)),
        ],
        out_specs=pl.BlockSpec((1, N, C), lambda b: (b, 0, 0)),
        scratch_shapes=[pltpu.VMEM((N, C), jnp.float32)],
        compiler_params=cparams,
    )(x, p["ln1_g"], p["ln1_b"], p["wq"], p["wkv"], p["wproj"], p["bproj"])

    # column-edge masks for the depthwise conv (computed once in plain JAX, tiny)
    cols = jnp.arange(N, dtype=jnp.int32) % W
    mask_l = (cols >= 1).astype(jnp.float32).reshape(N, 1)
    mask_r = (cols <= W - 2).astype(jnp.float32).reshape(N, 1)

    # --- LN2 + fc1 + DWConv3x3 + GELU + fc2 + residual (single fused kernel) ---
    out = pl.pallas_call(
        functools.partial(mlp_kernel, W=W),
        out_shape=jax.ShapeDtypeStruct((B, N, C), x.dtype),
        grid=(B,),
        in_specs=[
            pl.BlockSpec((1, N, C), lambda b: (b, 0, 0)),
            wfull((1, C)), wfull((1, C)),
            wfull((C, Chid)), wfull((1, Chid)),
            wfull((9, Chid)), wfull((1, Chid)),
            wfull((Chid, C)), wfull((1, C)),
            wfull((N, 1)), wfull((N, 1)),
        ],
        out_specs=pl.BlockSpec((1, N, C), lambda b: (b, 0, 0)),
        compiler_params=cparams,
    )(x1, p["ln2_g"], p["ln2_b"], p["w1"], p["b1"], p["wdw"], p["bdw"],
      p["w2"], p["b2"], mask_l, mask_r)
    return out


# ---------------------------------------------------------------------------
# Deterministic parameter init (shapes per Block.__init__; linear weights stored
# pre-transposed so y = x @ W, matching PyTorch's y = x @ weight.T). Matmul weights
# stored in bf16 (fp32 accumulation in-kernel); norm/bias/dwconv params in fp32.
# ---------------------------------------------------------------------------
def init_params(key, dim, num_heads, mlp_ratio=4.0):
    hidden = int(dim * mlp_ratio)
    ks = jax.random.split(key, 8)

    def tn(k, shape, std=0.02, dtype=jnp.float32):
        return (jax.random.normal(k, shape, jnp.float32) * std).astype(dtype)

    return {
        "ln1_g": jnp.ones((1, dim), jnp.float32),
        "ln1_b": jnp.zeros((1, dim), jnp.float32),
        "wq": tn(ks[0], (dim, dim), dtype=jnp.bfloat16),          # q: Linear(dim, dim, bias=False)
        "wkv": tn(ks[1], (dim, 2 * dim), dtype=jnp.bfloat16),     # kv: Linear(dim, 2*dim, bias=False)
        "wproj": tn(ks[2], (dim, dim), dtype=jnp.bfloat16),       # proj: Linear(dim, dim)
        "bproj": jnp.zeros((1, dim), jnp.float32),
        "ln2_g": jnp.ones((1, dim), jnp.float32),
        "ln2_b": jnp.zeros((1, dim), jnp.float32),
        "w1": tn(ks[3], (dim, hidden), dtype=jnp.bfloat16),       # fc1
        "b1": jnp.zeros((1, hidden), jnp.float32),
        # depthwise conv weight: torch (hidden, 1, 3, 3) -> stored as (9, hidden),
        # row (di*3+dj) holds weight[:, 0, di, dj]; fan_out = 9 -> std = sqrt(2/9)
        "wdw": tn(ks[4], (9, hidden), std=(2.0 / 9.0) ** 0.5),
        "bdw": jnp.zeros((1, hidden), jnp.float32),
        "w2": tn(ks[5], (hidden, dim), dtype=jnp.bfloat16),       # fc2
        "b2": jnp.zeros((1, dim), jnp.float32),
    }


if __name__ == "__main__":
    B, H, W, C = 2, 8, 8, 32
    num_heads = 4
    N = H * W

    key = jax.random.PRNGKey(0)
    kx, kp = jax.random.split(key)
    x = jax.random.normal(kx, (B, N, C), jnp.float32)
    params = init_params(kp, C, num_heads, mlp_ratio=4.0)

    out = block_forward(x, H, W, params, num_heads)
    jax.block_until_ready(out)
    assert out.shape == (B, N, C)
    assert bool(jnp.isfinite(out).all())
    print("KERNEL_OK")
</pallas_src>

<mosaic_0001>
module attributes {stable_mosaic.version = 11 : i64} {
  func.func @attn_kernel(%arg0: i32, %arg1: memref<1x64x32xf32, #tpu.memory_space<vmem>>, %arg2: memref<1x32xf32, #tpu.memory_space<vmem>>, %arg3: memref<1x32xf32, #tpu.memory_space<vmem>>, %arg4: memref<32x32xbf16, #tpu.memory_space<vmem>>, %arg5: memref<32x64xbf16, #tpu.memory_space<vmem>>, %arg6: memref<32x32xbf16, #tpu.memory_space<vmem>>, %arg7: memref<1x32xf32, #tpu.memory_space<vmem>>, %arg8: memref<1x64x32xf32, #tpu.memory_space<vmem>>, %arg9: memref<64x32xf32, #tpu.memory_space<vmem>>) attributes {dimension_semantics = [#tpu.dimension_semantics<parallel>], iteration_bounds = array<i64: 2>, scalar_prefetch = 0 : i64, scratch_operands = 1 : i64, tpu.core_type = #tpu.core_type<tc>, window_params = [{transform_indices = @transform_0, window_bounds = array<i64: 1, 64, 32>}, {pipeline_mode = #tpu.pipeline_mode<synchronous>, transform_indices = @transform_1, window_bounds = array<i64: 1, 32>}, {pipeline_mode = #tpu.pipeline_mode<synchronous>, transform_indices = @transform_2, window_bounds = array<i64: 1, 32>}, {pipeline_mode = #tpu.pipeline_mode<synchronous>, transform_indices = @transform_3, window_bounds = array<i64: 32, 32>}, {pipeline_mode = #tpu.pipeline_mode<synchronous>, transform_indices = @transform_4, window_bounds = array<i64: 32, 64>}, {pipeline_mode = #tpu.pipeline_mode<synchronous>, transform_indices = @transform_5, window_bounds = array<i64: 32, 32>}, {pipeline_mode = #tpu.pipeline_mode<synchronous>, transform_indices = @transform_6, window_bounds = array<i64: 1, 32>}, {transform_indices = @transform_7, window_bounds = array<i64: 1, 64, 32>}]} {
    %c0 = arith.constant 0 : index
    %c0_0 = arith.constant 0 : index
    %c0_1 = arith.constant 0 : index
    %0 = vector.load %arg1[%c0, %c0_0, %c0_1] : memref<1x64x32xf32, #tpu.memory_space<vmem>>, vector<1x64x32xf32>
    %1 = vector.shape_cast %0 : vector<1x64x32xf32> to vector<64x32xf32>
    %c0_2 = arith.constant 0 : index
    %c0_3 = arith.constant 0 : index
    %2 = vector.load %arg2[%c0_2, %c0_3] : memref<1x32xf32, #tpu.memory_space<vmem>>, vector<1x32xf32>
    %3 = vector.shape_cast %2 : vector<1x32xf32> to vector<32xf32>
    %c0_4 = arith.constant 0 : index
    %c0_5 = arith.constant 0 : index
    %4 = vector.load %arg3[%c0_4, %c0_5] : memref<1x32xf32, #tpu.memory_space<vmem>>, vector<1x32xf32>
    %5 = vector.shape_cast %4 : vector<1x32xf32> to vector<32xf32>
    %cst = arith.constant dense<0.000000e+00> : vector<64xf32>
    %6 = vector.multi_reduction <add>, %1, %cst [1] : vector<64x32xf32> to vector<64xf32>
    %7 = vector.shape_cast %6 : vector<64xf32> to vector<64x1xf32>
    %cst_6 = arith.constant 3.200000e+01 : f32
    %8 = vector.broadcast %cst_6 : f32 to vector<64x1xf32>
    %9 = arith.divf %7, %8 : vector<64x1xf32>
    %10 = vector.broadcast %9 : vector<64x1xf32> to vector<64x32xf32>
    %11 = arith.subf %1, %10 : vector<64x32xf32>
    %12 = arith.mulf %11, %11 : vector<64x32xf32>
    %cst_7 = arith.constant dense<0.000000e+00> : vector<64xf32>
    %13 = vector.multi_reduction <add>, %12, %cst_7 [1] : vector<64x32xf32> to vector<64xf32>
    %14 = vector.shape_cast %13 : vector<64xf32> to vector<64x1xf32>
    %cst_8 = arith.constant 3.200000e+01 : f32
    %15 = vector.broadcast %cst_8 : f32 to vector<64x1xf32>
    %16 = arith.divf %14, %15 : vector<64x1xf32>
    %17 = vector.broadcast %9 : vector<64x1xf32> to vector<64x32xf32>
    %18 = arith.subf %1, %17 : vector<64x32xf32>
    %cst_9 = arith.constant 9.99999974E-6 : f32
    %19 = vector.broadcast %cst_9 : f32 to vector<64x1xf32>
    %20 = arith.addf %16, %19 : vector<64x1xf32>
    %21 = math.rsqrt %20 : vector<64x1xf32>
    %22 = vector.broadcast %21 : vector<64x1xf32> to vector<64x32xf32>
    %23 = arith.mulf %18, %22 : vector<64x32xf32>
    %24 = vector.shape_cast %3 : vector<32xf32> to vector<1x32xf32>
    %25 = vector.broadcast %24 : vector<1x32xf32> to vector<64x32xf32>
    %26 = arith.mulf %23, %25 : vector<64x32xf32>
    %27 = vector.shape_cast %5 : vector<32xf32> to vector<1x32xf32>
    %28 = vector.broadcast %27 : vector<1x32xf32> to vector<64x32xf32>
    %29 = arith.addf %26, %28 : vector<64x32xf32>
    %30 = arith.truncf %29 : vector<64x32xf32> to vector<64x32xbf16>
    %c0_10 = arith.constant 0 : index
    %c0_11 = arith.constant 0 : index
    %31 = vector.load %arg4[%c0_10, %c0_11] : memref<32x32xbf16, #tpu.memory_space<vmem>>, vector<32x32xbf16>
    %cst_12 = arith.constant dense<0.000000e+00> : vector<64x32xf32>
    %32 = tpu.matmul %30, %31, %cst_12 {dimension_numbers = #tpu.dot_dimension_numbers<[1], [0], [0], [1], [0, 0, 1, 1], [], []>} : vector<64x32xbf16>, vector<32x32xbf16>, vector<64x32xf32> -> vector<64x32xf32>
    %cst_13 = arith.constant 0.353553385 : f32
    %33 = vector.broadcast %cst_13 : f32 to vector<64x32xf32>
    %34 = arith.mulf %32, %33 : vector<64x32xf32>
    %c0_14 = arith.constant 0 : index
    %c0_15 = arith.constant 0 : index
    %35 = vector.load %arg5[%c0_14, %c0_15] : memref<32x64xbf16, #tpu.memory_space<vmem>>, vector<32x64xbf16>
    %cst_16 = arith.constant dense<0.000000e+00> : vector<64x64xf32>
    %36 = tpu.matmul %30, %35, %cst_16 {dimension_numbers = #tpu.dot_dimension_numbers<[1], [0], [0], [1], [0, 0, 1, 1], [], []>} : vector<64x32xbf16>, vector<32x64xbf16>, vector<64x64xf32> -> vector<64x64xf32>
    %37 = vector.extract_strided_slice %34 {offsets = [0, 0], sizes = [64, 8], strides = [1, 1]} : vector<64x32xf32> to vector<64x8xf32>
    %38 = arith.truncf %37 : vector<64x8xf32> to vector<64x8xbf16>
    %39 = vector.extract_strided_slice %36 {offsets = [0, 0], sizes = [64, 8], strides = [1, 1]} : vector<64x64xf32> to vector<64x8xf32>
    %40 = arith.truncf %39 : vector<64x8xf32> to vector<64x8xbf16>
    %41 = vector.extract_strided_slice %36 {offsets = [0, 32], sizes = [64, 8], strides = [1, 1]} : vector<64x64xf32> to vector<64x8xf32>
    %42 = arith.truncf %41 : vector<64x8xf32> to vector<64x8xbf16>
    %cst_17 = arith.constant dense<0.000000e+00> : vector<64x64xf32>
    %43 = tpu.matmul %38, %40, %cst_17 {dimension_numbers = #tpu.dot_dimension_numbers<[1], [1], [0], [0], [0, 0, 1, 0], [], []>} : vector<64x8xbf16>, vector<64x8xbf16>, vector<64x64xf32> -> vector<64x64xf32>
    %cst_18 = arith.constant dense<0xFF800000> : vector<64xf32>
    %44 = vector.multi_reduction <maximumf>, %43, %cst_18 [1] : vector<64x64xf32> to vector<64xf32>
    %45 = vector.shape_cast %44 : vector<64xf32> to vector<64x1xf32>
    %46 = vector.broadcast %45 : vector<64x1xf32> to vector<64x64xf32>
    %47 = arith.subf %43, %46 : vector<64x64xf32>
    %48 = math.exp %47 : vector<64x64xf32>
    %cst_19 = arith.constant dense<0.000000e+00> : vector<64xf32>
    %49 = vector.multi_reduction <add>, %48, %cst_19 [1] : vector<64x64xf32> to vector<64xf32>
    %50 = vector.shape_cast %49 : vector<64xf32> to vector<64x1xf32>
    %51 = tpu.reciprocal %50 {approx = true} : vector<64x1xf32> -> vector<64x1xf32>
    %52 = vector.broadcast %51 : vector<64x1xf32> to vector<64x64xf32>
    %53 = arith.mulf %48, %52 : vector<64x64xf32>
    %54 = arith.truncf %53 : vector<64x64xf32> to vector<64x64xbf16>
    %cst_20 = arith.constant dense<0.000000e+00> : vector<64x8xf32>
    %55 = tpu.matmul %54, %42, %cst_20 {dimension_numbers = #tpu.dot_dimension_numbers<[1], [0], [0], [1], [0, 0, 1, 1], [], []>} : vector<64x64xbf16>, vector<64x8xbf16>, vector<64x8xf32> -> vector<64x8xf32>
    %c0_21 = arith.constant 0 : index
    %c0_22 = arith.constant 0 : index
    %56 = vector.load %arg9[%c0_21, %c0_22] : memref<64x32xf32, #tpu.memory_space<vmem>>, vector<64x8xf32>
    tpu.vector_store %arg9[%c0_21, %c0_22], %55 {strides = array<i32>} : memref<64x32xf32, #tpu.memory_space<vmem>>, vector<64x8xf32>,
    %57 = vector.extract_strided_slice %34 {offsets = [0, 8], sizes = [64, 8], strides = [1, 1]} : vector<64x32xf32> to vector<64x8xf32>
    %58 = arith.truncf %57 : vector<64x8xf32> to vector<64x8xbf16>
    %59 = vector.extract_strided_slice %36 {offsets = [0, 8], sizes = [64, 8], strides = [1, 1]} : vector<64x64xf32> to vector<64x8xf32>
    %60 = arith.truncf %59 : vector<64x8xf32> to vector<64x8xbf16>
    %61 = vector.extract_strided_slice %36 {offsets = [0, 40], sizes = [64, 8], strides = [1, 1]} : vector<64x64xf32> to vector<64x8xf32>
    %62 = arith.truncf %61 : vector<64x8xf32> to vector<64x8xbf16>
    %cst_23 = arith.constant dense<0.000000e+00> : vector<64x64xf32>
    %63 = tpu.matmul %58, %60, %cst_23 {dimension_numbers = #tpu.dot_dimension_numbers<[1], [1], [0], [0], [0, 0, 1, 0], [], []>} : vector<64x8xbf16>, vector<64x8xbf16>, vector<64x64xf32> -> vector<64x64xf32>
    %cst_24 = arith.constant dense<0xFF800000> : vector<64xf32>
    %64 = vector.multi_reduction <maximumf>, %63, %cst_24 [1] : vector<64x64xf32> to vector<64xf32>
    %65 = vector.shape_cast %64 : vector<64xf32> to vector<64x1xf32>
    %66 = vector.broadcast %65 : vector<64x1xf32> to vector<64x64xf32>
    %67 = arith.subf %63, %66 : vector<64x64xf32>
    %68 = math.exp %67 : vector<64x64xf32>
    %cst_25 = arith.constant dense<0.000000e+00> : vector<64xf32>
    %69 = vector.multi_reduction <add>, %68, %cst_25 [1] : vector<64x64xf32> to vector<64xf32>
    %70 = vector.shape_cast %69 : vector<64xf32> to vector<64x1xf32>
    %71 = tpu.reciprocal %70 {approx = true} : vector<64x1xf32> -> vector<64x1xf32>
    %72 = vector.broadcast %71 : vector<64x1xf32> to vector<64x64xf32>
    %73 = arith.mulf %68, %72 : vector<64x64xf32>
    %74 = arith.truncf %73 : vector<64x64xf32> to vector<64x64xbf16>
    %cst_26 = arith.constant dense<0.000000e+00> : vector<64x8xf32>
    %75 = tpu.matmul %74, %62, %cst_26 {dimension_numbers = #tpu.dot_dimension_numbers<[1], [0], [0], [1], [0, 0, 1, 1], [], []>} : vector<64x64xbf16>, vector<64x8xbf16>, vector<64x8xf32> -> vector<64x8xf32>
    %c0_27 = arith.constant 0 : index
    %c8 = arith.constant 8 : index
    %76 = vector.load %arg9[%c0_27, %c8] : memref<64x32xf32, #tpu.memory_space<vmem>>, vector<64x8xf32>
    tpu.vector_store %arg9[%c0_27, %c8], %75 {strides = array<i32>} : memref<64x32xf32, #tpu.memory_space<vmem>>, vector<64x8xf32>,
    %77 = vector.extract_strided_slice %34 {offsets = [0, 16], sizes = [64, 8], strides = [1, 1]} : vector<64x32xf32> to vector<64x8xf32>
    %78 = arith.truncf %77 : vector<64x8xf32> to vector<64x8xbf16>
    %79 = vector.extract_strided_slice %36 {offsets = [0, 16], sizes = [64, 8], strides = [1, 1]} : vector<64x64xf32> to vector<64x8xf32>
    %80 = arith.truncf %79 : vector<64x8xf32> to vector<64x8xbf16>
    %81 = vector.extract_strided_slice %36 {offsets = [0, 48], sizes = [64, 8], strides = [1, 1]} : vector<64x64xf32> to vector<64x8xf32>
    %82 = arith.truncf %81 : vector<64x8xf32> to vector<64x8xbf16>
    %cst_28 = arith.constant dense<0.000000e+00> : vector<64x64xf32>
    %83 = tpu.matmul %78, %80, %cst_28 {dimension_numbers = #tpu.dot_dimension_numbers<[1], [1], [0], [0], [0, 0, 1, 0], [], []>} : vector<64x8xbf16>, vector<64x8xbf16>, vector<64x64xf32> -> vector<64x64xf32>
    %cst_29 = arith.constant dense<0xFF800000> : vector<64xf32>
    %84 = vector.multi_reduction <maximumf>, %83, %cst_29 [1] : vector<64x64xf32> to vector<64xf32>
    %85 = vector.shape_cast %84 : vector<64xf32> to vector<64x1xf32>
    %86 = vector.broadcast %85 : vector<64x1xf32> to vector<64x64xf32>
    %87 = arith.subf %83, %86 : vector<64x64xf32>
    %88 = math.exp %87 : vector<64x64xf32>
    %cst_30 = arith.constant dense<0.000000e+00> : vector<64xf32>
    %89 = vector.multi_reduction <add>, %88, %cst_30 [1] : vector<64x64xf32> to vector<64xf32>
    %90 = vector.shape_cast %89 : vector<64xf32> to vector<64x1xf32>
    %91 = tpu.reciprocal %90 {approx = true} : vector<64x1xf32> -> vector<64x1xf32>
    %92 = vector.broadcast %91 : vector<64x1xf32> to vector<64x64xf32>
    %93 = arith.mulf %88, %92 : vector<64x64xf32>
    %94 = arith.truncf %93 : vector<64x64xf32> to vector<64x64xbf16>
    %cst_31 = arith.constant dense<0.000000e+00> : vector<64x8xf32>
    %95 = tpu.matmul %94, %82, %cst_31 {dimension_numbers = #tpu.dot_dimension_numbers<[1], [0], [0], [1], [0, 0, 1, 1], [], []>} : vector<64x64xbf16>, vector<64x8xbf16>, vector<64x8xf32> -> vector<64x8xf32>
    %c0_32 = arith.constant 0 : index
    %c16 = arith.constant 16 : index
    %96 = vector.load %arg9[%c0_32, %c16] : memref<64x32xf32, #tpu.memory_space<vmem>>, vector<64x8xf32>
    tpu.vector_store %arg9[%c0_32, %c16], %95 {strides = array<i32>} : memref<64x32xf32, #tpu.memory_space<vmem>>, vector<64x8xf32>,
    %97 = vector.extract_strided_slice %34 {offsets = [0, 24], sizes = [64, 8], strides = [1, 1]} : vector<64x32xf32> to vector<64x8xf32>
    %98 = arith.truncf %97 : vector<64x8xf32> to vector<64x8xbf16>
    %99 = vector.extract_strided_slice %36 {offsets = [0, 24], sizes = [64, 8], strides = [1, 1]} : vector<64x64xf32> to vector<64x8xf32>
    %100 = arith.truncf %99 : vector<64x8xf32> to vector<64x8xbf16>
    %101 = vector.extract_strided_slice %36 {offsets = [0, 56], sizes = [64, 8], strides = [1, 1]} : vector<64x64xf32> to vector<64x8xf32>
    %102 = arith.truncf %101 : vector<64x8xf32> to vector<64x8xbf16>
    %cst_33 = arith.constant dense<0.000000e+00> : vector<64x64xf32>
    %103 = tpu.matmul %98, %100, %cst_33 {dimension_numbers = #tpu.dot_dimension_numbers<[1], [1], [0], [0], [0, 0, 1, 0], [], []>} : vector<64x8xbf16>, vector<64x8xbf16>, vector<64x64xf32> -> vector<64x64xf32>
    %cst_34 = arith.constant dense<0xFF800000> : vector<64xf32>
    %104 = vector.multi_reduction <maximumf>, %103, %cst_34 [1] : vector<64x64xf32> to vector<64xf32>
    %105 = vector.shape_cast %104 : vector<64xf32> to vector<64x1xf32>
    %106 = vector.broadcast %105 : vector<64x1xf32> to vector<64x64xf32>
    %107 = arith.subf %103, %106 : vector<64x64xf32>
    %108 = math.exp %107 : vector<64x64xf32>
    %cst_35 = arith.constant dense<0.000000e+00> : vector<64xf32>
    %109 = vector.multi_reduction <add>, %108, %cst_35 [1] : vector<64x64xf32> to vector<64xf32>
    %110 = vector.shape_cast %109 : vector<64xf32> to vector<64x1xf32>
    %111 = tpu.reciprocal %110 {approx = true} : vector<64x1xf32> -> vector<64x1xf32>
    %112 = vector.broadcast %111 : vector<64x1xf32> to vector<64x64xf32>
    %113 = arith.mulf %108, %112 : vector<64x64xf32>
    %114 = arith.truncf %113 : vector<64x64xf32> to vector<64x64xbf16>
    %cst_36 = arith.constant dense<0.000000e+00> : vector<64x8xf32>
    %115 = tpu.matmul %114, %102, %cst_36 {dimension_numbers = #tpu.dot_dimension_numbers<[1], [0], [0], [1], [0, 0, 1, 1], [], []>} : vector<64x64xbf16>, vector<64x8xbf16>, vector<64x8xf32> -> vector<64x8xf32>
    %c0_37 = arith.constant 0 : index
    %c24 = arith.constant 24 : index
    %116 = vector.load %arg9[%c0_37, %c24] : memref<64x32xf32, #tpu.memory_space<vmem>>, vector<64x8xf32>
    tpu.vector_store %arg9[%c0_37, %c24], %115 {strides = array<i32>} : memref<64x32xf32, #tpu.memory_space<vmem>>, vector<64x8xf32>,
    %c0_38 = arith.constant 0 : index
    %c0_39 = arith.constant 0 : index
    %117 = vector.load %arg9[%c0_38, %c0_39] : memref<64x32xf32, #tpu.memory_space<vmem>>, vector<64x32xf32>
    %118 = arith.truncf %117 : vector<64x32xf32> to vector<64x32xbf16>
    %c0_40 = arith.constant 0 : index
    %c0_41 = arith.constant 0 : index
    %119 = vector.load %arg6[%c0_40, %c0_41] : memref<32x32xbf16, #tpu.memory_space<vmem>>, vector<32x32xbf16>
    %cst_42 = arith.constant dense<0.000000e+00> : vector<64x32xf32>
    %120 = tpu.matmul %118, %119, %cst_42 {dimension_numbers = #tpu.dot_dimension_numbers<[1], [0], [0], [1], [0, 0, 1, 1], [], []>} : vector<64x32xbf16>, vector<32x32xbf16>, vector<64x32xf32> -> vector<64x32xf32>
    %c0_43 = arith.constant 0 : index
    %c0_44 = arith.constant 0 : index
    %121 = vector.load %arg7[%c0_43, %c0_44] : memref<1x32xf32, #tpu.memory_space<vmem>>, vector<1x32xf32>
    %122 = vector.shape_cast %121 : vector<1x32xf32> to vector<32xf32>
    %123 = vector.shape_cast %122 : vector<32xf32> to vector<1x32xf32>
    %124 = vector.broadcast %123 : vector<1x32xf32> to vector<64x32xf32>
    %125 = arith.addf %120, %124 : vector<64x32xf32>
    %126 = arith.addf %1, %125 : vector<64x32xf32>
    %c0_45 = arith.constant 0 : index
    %c0_46 = arith.constant 0 : index
    %c0_47 = arith.constant 0 : index
    %127 = vector.load %arg8[%c0_45, %c0_46, %c0_47] : memref<1x64x32xf32, #tpu.memory_space<vmem>>, vector<1x64x32xf32>
    %128 = vector.shape_cast %127 : vector<1x64x32xf32> to vector<64x32xf32>
    %129 = vector.shape_cast %126 : vector<64x32xf32> to vector<1x64x32xf32>
    tpu.vector_store %arg8[%c0_45, %c0_46, %c0_47], %129 {strides = array<i32>} : memref<1x64x32xf32, #tpu.memory_space<vmem>>, vector<1x64x32xf32>,
    return
  }
  func.func @transform_0(%arg0: i32) -> (i32, i32, i32) {
    %c0_i32 = arith.constant 0 : i32
    %c0_i32_0 = arith.constant 0 : i32
    %c0_i32_1 = arith.constant 0 : i32
    return %arg0, %c0_i32, %c0_i32_0 : i32, i32, i32
  }
  func.func @transform_1(%arg0: i32) -> (i32, i32) {
    %c0_i32 = arith.constant 0 : i32
    %c0_i32_0 = arith.constant 0 : i32
    %c0_i32_1 = arith.constant 0 : i32
    return %c0_i32, %c0_i32_0 : i32, i32
  }
  func.func @transform_2(%arg0: i32) -> (i32, i32) {
    %c0_i32 = arith.constant 0 : i32
    %c0_i32_0 = arith.constant 0 : i32
    %c0_i32_1 = arith.constant 0 : i32
    return %c0_i32, %c0_i32_0 : i32, i32
  }
  func.func @transform_3(%arg0: i32) -> (i32, i32) {
    %c0_i32 = arith.constant 0 : i32
    %c0_i32_0 = arith.constant 0 : i32
    %c0_i32_1 = arith.constant 0 : i32
    return %c0_i32, %c0_i32_0 : i32, i32
  }
  func.func @transform_4(%arg0: i32) -> (i32, i32) {
    %c0_i32 = arith.constant 0 : i32
    %c0_i32_0 = arith.constant 0 : i32
    %c0_i32_1 = arith.constant 0 : i32
    return %c0_i32, %c0_i32_0 : i32, i32
  }
  func.func @transform_5(%arg0: i32) -> (i32, i32) {
    %c0_i32 = arith.constant 0 : i32
    %c0_i32_0 = arith.constant 0 : i32
    %c0_i32_1 = arith.constant 0 : i32
    return %c0_i32, %c0_i32_0 : i32, i32
  }
  func.func @transform_6(%arg0: i32) -> (i32, i32) {
    %c0_i32 = arith.constant 0 : i32
    %c0_i32_0 = arith.constant 0 : i32
    %c0_i32_1 = arith.constant 0 : i32
    return %c0_i32, %c0_i32_0 : i32, i32
  }
  func.func @transform_7(%arg0: i32) -> (i32, i32, i32) {
    %c0_i32 = arith.constant 0 : i32
    %c0_i32_0 = arith.constant 0 : i32
    %c0_i32_1 = arith.constant 0 : i32
    return %arg0, %c0_i32, %c0_i32_0 : i32, i32, i32
  }
}

</mosaic_0001>

<llo_original>
// kernel: tpu_custom_call.1
$region0: #{tpu_custom_call.1}
  #allocation0 [shape = 'u32[]', space=smem, size = 0x4, offset = 0x4, fixed_abs, tag = 'smem constant byte address 0x4 - core index']
  #allocation1 [shape = 'u32[144,128]{1,0:T(1,128)}', space=vmem, size = 0x12000, scoped, tag = 'internal scratch']
  #allocation2 [shape = 'f32[64,32]{1,0:T(8,128)}', space=vmem, size = 0x8000, scoped, tag = 'scratch operand']
  %s0 = inlined_call_operand.hbm [shape: f32[2,64,32], index: 0, kind: input, shape index: {}]
  %s1 = inlined_call_operand.hbm [shape: f32[1,32], index: 1, kind: input, shape index: {}]
  %s2 = inlined_call_operand.hbm [shape: f32[1,32], index: 2, kind: input, shape index: {}]
  %s3 = inlined_call_operand.hbm [shape: bf16[32,32], index: 3, kind: input, shape index: {}]
  %s4 = inlined_call_operand.hbm [shape: bf16[32,64], index: 4, kind: input, shape index: {}]
  %s5 = inlined_call_operand.hbm [shape: bf16[32,32], index: 5, kind: input, shape index: {}]
  %s6 = inlined_call_operand.hbm [shape: f32[1,32], index: 6, kind: input, shape index: {}]
  %s7 = inlined_call_operand.hbm [shape: f32[2,64,32], index: 7, kind: output, shape index: {}]
  %s8 = sld [smem:[#allocation0]]
  $region89: #{tpu_custom_call.1} parent=0
    _
  %s10 = ssub.s32 1, %s8
  %s11 = scalar_select 0, %s10, %s8
  $region1: #{tpu_custom_call.1} parent=0
    #allocation3 [shape = 'u8[65536]{0}', space=vmem, size = 0x10000, scoped, tag = 'input window, operand 0']
    #allocation4 [shape = 's32[2]{0}', space=sflag, size = 0x8, scoped, tag = 'scoped memory for tpu_custom_call.1']
    #allocation5 [shape = 's32[2]{0}', space=sflag, size = 0x8, scoped, tag = 'scoped memory for tpu_custom_call.1']
    #allocation6 [shape = 'u8[512]{0}', space=vmem, size = 0x400, scoped, tag = 'input window, operand 1, single buffered']
    #allocation7 [shape = 's32[1]{0}', space=sflag, size = 0x4, scoped, tag = 'scoped memory for tpu_custom_call.1']
    #allocation8 [shape = 'u8[512]{0}', space=vmem, size = 0x400, scoped, tag = 'input window, operand 2, single buffered']
    #allocation9 [shape = 'u8[8192]{0}', space=vmem, size = 0x2000, scoped, tag = 'input window, operand 3, single buffered']
    #allocation10 [shape = 's32[1]{0}', space=sflag, size = 0x4, scoped, tag = 'scoped memory for tpu_custom_call.1']
    #allocation11 [shape = 'u8[8192]{0}', space=vmem, size = 0x2000, scoped, tag = 'input window, operand 4, single buffered']
    #allocation12 [shape = 'u8[8192]{0}', space=vmem, size = 0x2000, scoped, tag = 'input window, operand 5, single buffered']
    #allocation13 [shape = 's32[1]{0}', space=sflag, size = 0x4, scoped, tag = 'scoped memory for tpu_custom_call.1']
    #allocation14 [shape = 'u8[512]{0}', space=vmem, size = 0x400, scoped, tag = 'input window, operand 6, single buffered']
    #allocation15 [shape = 'u8[65536]{0}', space=vmem, size = 0x10000, scoped, tag = 'output window, operand 0']
    %12 = vsyncpa [#allocation4], 0
    %s13 = scalar_lea.sflag [#allocation4], 1
    %14 = vsyncpa %s13, 0
    %15 = vsyncpa [#allocation7], 0
    %16 = vsyncpa [#allocation10], 0
    %17 = vsyncpa [#allocation13], 0
    %18 = vsyncpa [#allocation5], 0
    %s19 = scalar_lea.sflag [#allocation5], 1
    %20 = vsyncpa %s19, 0
    loop: start=0, step=1, limit=4
    $region2: #{tpu_custom_call.1} parent=1 // loop_pre_header
      _
    $region3: #{tpu_custom_call.1} parent=1 // loop_header
      %s22 = sphi 0, %s26
      %p23 = scmp.ge.s32.totalorder %s22, 4
      %s32 = sphi 0, %s34
      %s35 = sphi 0, %s32
      %s36 = sphi 0, %s35
      %s52 = sphi 0, %s36
      %s56 = sphi 0, %s56
      %s58 = sphi 0, %s56
      %s59 = sphi 0, %s58
      %s73 = sphi 0, %s59
      %s77 = sphi 0, %s77
      %s79 = sphi 0, %s77
      %s80 = sphi 0, %s79
      %s94 = sphi 0, %s80
      %s98 = sphi 0, %s98
      %s100 = sphi 0, %s98
      %s101 = sphi 0, %s100
      %s115 = sphi 0, %s101
      %s119 = sphi 0, %s119
      %s121 = sphi 0, %s119
      %s122 = sphi 0, %s121
      %s136 = sphi 0, %s122
      %s140 = sphi 0, %s140
      %s142 = sphi 0, %s140
      %s143 = sphi 0, %s142
      %s157 = sphi 0, %s143
      %s161 = sphi 0, %s161
      %s163 = sphi 0, %s161
      %s164 = sphi 0, %s163
      %s178 = sphi 0, %s164
      %s184 = sphi 0, %s186
      %s187 = sphi 0, %s184
      %s188 = sphi 0, %s187
      %s204 = sphi 0, %s188
    $region4: #{tpu_custom_call.1} parent=1 // loop_header_branch
      %25 = sbr.rel (%p23) target = $region8
    $region5: #{tpu_custom_call.1} parent=1 // loop_body
      %s27 = ssub.s32 %s22, 1
      %s28 = ssub.s32 %s22, 2
      %s29 = sadd.s32 %s22, 1
      %s30 = ssub.s32 %s22, %s29
      %p31 = scmp.eq.s32.totalorder %s30, 0
      %s33 = sadd.s32 %s32, 1
      %s34 = scalar_select %p31, %s32, %s33
      %p37 = pneg %p31
      %p38 = scmp.eq.s32.totalorder %s22, 1
      %p39 = por %p37, %p38
      %p40 = scmp.ne.s32.totalorder %s32, %s35
      %p41 = scmp.eq.s32.totalorder %s22, 0
      %p42 = por %p40, %p41
      %p43 = scmp.ne.s32.totalorder %s32, %s35
      %p44 = scmp.eq.s32.totalorder %s27, 1
      %p45 = por %p43, %p44
      %p46 = scmp.ne.s32.totalorder %s35, %s36
      %p47 = scmp.eq.s32.totalorder %s27, 0
      %p48 = por %p46, %p47
      %p49 = scmp.ne.s32.totalorder %s35, %s36
      %p50 = scmp.eq.s32.totalorder %s28, 1
      %p51 = por %p49, %p50
      %p53 = scmp.ne.s32.totalorder %s36, %s52
      %p54 = scmp.eq.s32.totalorder %s28, 0
      %p55 = por %p53, %p54
      %s57 = sadd.s32 %s56, 1
      %p60 = scmp.eq.s32.totalorder %s22, 1
      %p61 = scmp.ne.s32.totalorder %s56, %s58
      %p62 = scmp.eq.s32.totalorder %s22, 0
      %p63 = por %p61, %p62
      %p64 = scmp.ne.s32.totalorder %s56, %s58
      %p65 = scmp.eq.s32.totalorder %s27, 1
      %p66 = por %p64, %p65
      %p67 = scmp.ne.s32.totalorder %s58, %s59
      %p68 = scmp.eq.s32.totalorder %s27, 0
      %p69 = por %p67, %p68
      %p70 = scmp.ne.s32.totalorder %s58, %s59
      %p71 = scmp.eq.s32.totalorder %s28, 1
      %p72 = por %p70, %p71
      %p74 = scmp.ne.s32.totalorder %s59, %s73
      %p75 = scmp.eq.s32.totalorder %s28, 0
      %p76 = por %p74, %p75
      %s78 = sadd.s32 %s77, 1
      %p81 = scmp.eq.s32.totalorder %s22, 1
      %p82 = scmp.ne.s32.totalorder %s77, %s79
      %p83 = scmp.eq.s32.totalorder %s22, 0
      %p84 = por %p82, %p83
      %p85 = scmp.ne.s32.totalorder %s77, %s79
      %p86 = scmp.eq.s32.totalorder %s27, 1
      %p87 = por %p85, %p86
      %p88 = scmp.ne.s32.totalorder %s79, %s80
      %p89 = scmp.eq.s32.totalorder %s27, 0
      %p90 = por %p88, %p89
      %p91 = scmp.ne.s32.totalorder %s79, %s80
      %p92 = scmp.eq.s32.totalorder %s28, 1
      %p93 = por %p91, %p92
      %p95 = scmp.ne.s32.totalorder %s80, %s94
      %p96 = scmp.eq.s32.totalorder %s28, 0
      %p97 = por %p95, %p96
      %s99 = sadd.s32 %s98, 1
      %p102 = scmp.eq.s32.totalorder %s22, 1
      %p103 = scmp.ne.s32.totalorder %s98, %s100
      %p104 = scmp.eq.s32.totalorder %s22, 0
      %p105 = por %p103, %p104
      %p106 = scmp.ne.s32.totalorder %s98, %s100
      %p107 = scmp.eq.s32.totalorder %s27, 1
      %p108 = por %p106, %p107
      %p109 = scmp.ne.s32.totalorder %s100, %s101
      %p110 = scmp.eq.s32.totalorder %s27, 0
      %p111 = por %p109, %p110
      %p112 = scmp.ne.s32.totalorder %s100, %s101
      %p113 = scmp.eq.s32.totalorder %s28, 1
      %p114 = por %p112, %p113
      %p116 = scmp.ne.s32.totalorder %s101, %s115
      %p117 = scmp.eq.s32.totalorder %s28, 0
      %p118 = por %p116, %p117
      %s120 = sadd.s32 %s119, 1
      %p123 = scmp.eq.s32.totalorder %s22, 1
      %p124 = scmp.ne.s32.totalorder %s119, %s121
      %p125 = scmp.eq.s32.totalorder %s22, 0
      %p126 = por %p124, %p125
      %p127 = scmp.ne.s32.totalorder %s119, %s121
      %p128 = scmp.eq.s32.totalorder %s27, 1
      %p129 = por %p127, %p128
      %p130 = scmp.ne.s32.totalorder %s121, %s122
      %p131 = scmp.eq.s32.totalorder %s27, 0
      %p132 = por %p130, %p131
      %p133 = scmp.ne.s32.totalorder %s121, %s122
      %p134 = scmp.eq.s32.totalorder %s28, 1
      %p135 = por %p133, %p134
      %p137 = scmp.ne.s32.totalorder %s122, %s136
      %p138 = scmp.eq.s32.totalorder %s28, 0
      %p139 = por %p137, %p138
      %s141 = sadd.s32 %s140, 1
      %p144 = scmp.eq.s32.totalorder %s22, 1
      %p145 = scmp.ne.s32.totalorder %s140, %s142
      %p146 = scmp.eq.s32.totalorder %s22, 0
      %p147 = por %p145, %p146
      %p148 = scmp.ne.s32.totalorder %s140, %s142
      %p149 = scmp.eq.s32.totalorder %s27, 1
      %p150 = por %p148, %p149
      %p151 = scmp.ne.s32.totalorder %s142, %s143
      %p152 = scmp.eq.s32.totalorder %s27, 0
      %p153 = por %p151, %p152
      %p154 = scmp.ne.s32.totalorder %s142, %s143
      %p155 = scmp.eq.s32.totalorder %s28, 1
      %p156 = por %p154, %p155
      %p158 = scmp.ne.s32.totalorder %s143, %s157
      %p159 = scmp.eq.s32.totalorder %s28, 0
      %p160 = por %p158, %p159
      %s162 = sadd.s32 %s161, 1
      %p165 = scmp.eq.s32.totalorder %s22, 1
      %p166 = scmp.ne.s32.totalorder %s161, %s163
      %p167 = scmp.eq.s32.totalorder %s22, 0
      %p168 = por %p166, %p167
      %p169 = scmp.ne.s32.totalorder %s161, %s163
      %p170 = scmp.eq.s32.totalorder %s27, 1
      %p171 = por %p169, %p170
      %p172 = scmp.ne.s32.totalorder %s163, %s164
      %p173 = scmp.eq.s32.totalorder %s27, 0
      %p174 = por %p172, %p173
      %p175 = scmp.ne.s32.totalorder %s163, %s164
      %p176 = scmp.eq.s32.totalorder %s28, 1
      %p177 = por %p175, %p176
      %p179 = scmp.ne.s32.totalorder %s164, %s178
      %p180 = scmp.eq.s32.totalorder %s28, 0
      %p181 = por %p179, %p180
      %s182 = ssub.s32 %s22, %s29
      %p183 = scmp.eq.s32.totalorder %s182, 0
      %s185 = sadd.s32 %s184, 1
      %s186 = scalar_select %p183, %s184, %s185
      %p189 = pneg %p183
      %p190 = scmp.eq.s32.totalorder %s22, 1
      %p191 = por %p189, %p190
      %p192 = scmp.ne.s32.totalorder %s184, %s187
      %p193 = scmp.eq.s32.totalorder %s22, 0
      %p194 = por %p192, %p193
      %p195 = scmp.ne.s32.totalorder %s184, %s187
      %p196 = scmp.eq.s32.totalorder %s27, 1
      %p197 = por %p195, %p196
      %p198 = scmp.ne.s32.totalorder %s187, %s188
      %p199 = scmp.eq.s32.totalorder %s27, 0
      %p200 = por %p198, %p199
      %p201 = scmp.ne.s32.totalorder %s187, %s188
      %p202 = scmp.eq.s32.totalorder %s28, 1
      %p203 = por %p201, %p202
      %p205 = scmp.ne.s32.totalorder %s188, %s204
      %p206 = scmp.eq.s32.totalorder %s28, 0
      %p207 = por %p205, %p206
      %p208 = scmp.le.s32.totalorder 1, %s22
      %p209 = scmp.lt.s32.totalorder %s22, 3
      %p210 = pnand %p208, %p209
      %p211 = pneg %p210
      // Predicated region
      $region9: #{tpu_custom_call.1} parent=5 // pred_check
        _
      $region10: #{tpu_custom_call.1} parent=5 // pred_check_branch
        %213 = sbr.rel (%p210) target = $region12
      $region11: #{tpu_custom_call.1} parent=5 // pred_region
        %s214 = ssub.s32 %s22, 1
        // Predicated region
        $region13: #{tpu_custom_call.1} parent=11 // pred_check
          %p215 = pneg %p69
        $region14: #{tpu_custom_call.1} parent=11 // pred_check_branch
          %217 = sbr.rel (%p215) target = $region16
        $region15: #{tpu_custom_call.1} parent=11 // pred_region
          %s219 = ssub.s32 16, 16
          %220 = vsyncadd [#allocation7], %s219
          %s222 = sshll.u32 [#allocation6], 4
          %s223 = int_to_ptr.vmem [resolvable:$true] %s222
          %225 = dma.hbm_to_vmem [thread:$0]  %s1, 16, %s223, [#allocation7]
        $region16: #{tpu_custom_call.1} parent=11 // pred_fallthru
          _
        // Predicated region
        $region17: #{tpu_custom_call.1} parent=11 // pred_check
          %p226 = pneg %p90
        $region18: #{tpu_custom_call.1} parent=11 // pred_check_branch
          %228 = sbr.rel (%p226) target = $region20
        $region19: #{tpu_custom_call.1} parent=11 // pred_region
          %s230 = ssub.s32 16, 16
          %231 = vsyncadd [#allocation7], %s230
          %s233 = sshll.u32 [#allocation8], 4
          %s234 = int_to_ptr.vmem [resolvable:$true] %s233
          %236 = dma.hbm_to_vmem [thread:$0]  %s2, 16, %s234, [#allocation7]
        $region20: #{tpu_custom_call.1} parent=11 // pred_fallthru
          _
        // Predicated region
        $region21: #{tpu_custom_call.1} parent=11 // pred_check
          %p237 = pneg %p111
        $region22: #{tpu_custom_call.1} parent=11 // pred_check_branch
          %239 = sbr.rel (%p237) target = $region24
        $region23: #{tpu_custom_call.1} parent=11 // pred_region
          %s241 = ssub.s32 256, 256
          %242 = vsyncadd [#allocation10], %s241
          %s243 = sshll.u32 [#allocation9], 4
          %s244 = int_to_ptr.vmem [resolvable:$true] %s243
          %249 = dma.hbm_to_vmem [thread:$0]  %s3, 256, %s244, [#allocation10], 64, 64, 4
        $region24: #{tpu_custom_call.1} parent=11 // pred_fallthru
          _
        // Predicated region
        $region25: #{tpu_custom_call.1} parent=11 // pred_check
          %p250 = pneg %p132
        $region26: #{tpu_custom_call.1} parent=11 // pred_check_branch
          %252 = sbr.rel (%p250) target = $region28
        $region27: #{tpu_custom_call.1} parent=11 // pred_region
          %s254 = ssub.s32 256, 256
          %255 = vsyncadd [#allocation10], %s254
          %s256 = sshll.u32 [#allocation11], 4
          %s257 = int_to_ptr.vmem [resolvable:$true] %s256
          %262 = dma.hbm_to_vmem [thread:$0]  %s4, 256, %s257, [#allocation10], 64, 64, 4
        $region28: #{tpu_custom_call.1} parent=11 // pred_fallthru
          _
        // Predicated region
        $region29: #{tpu_custom_call.1} parent=11 // pred_check
          %p263 = pneg %p153
        $region30: #{tpu_custom_call.1} parent=11 // pred_check_branch
          %265 = sbr.rel (%p263) target = $region32
        $region31: #{tpu_custom_call.1} parent=11 // pred_region
          %s267 = ssub.s32 256, 256
          %268 = vsyncadd [#allocation13], %s267
          %s269 = sshll.u32 [#allocation12], 4
          %s270 = int_to_ptr.vmem [resolvable:$true] %s269
          %275 = dma.hbm_to_vmem [thread:$0]  %s5, 256, %s270, [#allocation13], 64, 64, 4
        $region32: #{tpu_custom_call.1} parent=11 // pred_fallthru
          _
        // Predicated region
        $region33: #{tpu_custom_call.1} parent=11 // pred_check
          %p276 = pneg %p174
        $region34: #{tpu_custom_call.1} parent=11 // pred_check_branch
          %278 = sbr.rel (%p276) target = $region36
        $region35: #{tpu_custom_call.1} parent=11 // pred_region
          %s280 = ssub.s32 16, 16
          %281 = vsyncadd [#allocation13], %s280
          %s283 = sshll.u32 [#allocation14], 4
          %s284 = int_to_ptr.vmem [resolvable:$true] %s283
          %286 = dma.hbm_to_vmem [thread:$0]  %s6, 16, %s284, [#allocation13]
        $region36: #{tpu_custom_call.1} parent=11 // pred_fallthru
          _
      $region12: #{tpu_custom_call.1} parent=5 // pred_fallthru
        _
      %p287 = scmp.lt.s32.totalorder %s22, 2
      // Predicated region
      $region37: #{tpu_custom_call.1} parent=5 // pred_check
        %p288 = pneg %p287
      $region38: #{tpu_custom_call.1} parent=5 // pred_check_branch
        %290 = sbr.rel (%p288) target = $region40
      $region39: #{tpu_custom_call.1} parent=5 // pred_region
        // Predicated region
        $region41: #{tpu_custom_call.1} parent=39 // pred_check
          %p291 = pneg %p42
        $region42: #{tpu_custom_call.1} parent=39 // pred_check_branch
          %293 = sbr.rel (%p291) target = $region44
        $region43: #{tpu_custom_call.1} parent=39 // pred_region
          %s294 = sand.u32 %s32, 1
          %s295 = scalar_lea.sflag [#allocation4], %s294
          %s296 = sand.u32 %s32, 1
          %s297 = smul.addr %s296, 64
          %s298 = scalar_lea.vmem [#allocation3], %s297
          %s300 = ssub.s32 1024, 1024
          %301 = vsyncadd %s295, %s300
          %s302 = smul.addr %s22, 8
          %s303 = smul.addr %s302, 128
          %s304 = scalar_lea.hbm %s0, %s303
          %s305 = sshll.u32 %s298, 4
          %s306 = int_to_ptr.vmem [resolvable:$true] %s305
          %311 = dma.hbm_to_vmem [thread:$0]  %s304, 1024, %s306, %s295, 128, 128, 8
        $region44: #{tpu_custom_call.1} parent=39 // pred_fallthru
          _
      $region40: #{tpu_custom_call.1} parent=5 // pred_fallthru
        _
      %p312 = scmp.le.s32.totalorder 1, %s22
      %p313 = scmp.lt.s32.totalorder %s22, 3
      %p314 = pnand %p312, %p313
      %p315 = pneg %p314
      // Predicated region
      $region45: #{tpu_custom_call.1} parent=5 // pred_check
        _
      $region46: #{tpu_custom_call.1} parent=5 // pred_check_branch
        %317 = sbr.rel (%p314) target = $region48
      $region47: #{tpu_custom_call.1} parent=5 // pred_region
        %s318 = ssub.s32 %s22, 1
        %s319 = sand.u32 %s35, 1
        %s320 = scalar_lea.sflag [#allocation4], %s319
        %s321 = sand.u32 %s35, 1
        %s322 = smul.addr %s321, 64
        %s323 = scalar_lea.vmem [#allocation3], %s322
        // Predicated region
        $region49: #{tpu_custom_call.1} parent=47 // pred_check
          %p324 = pneg %p48
        $region50: #{tpu_custom_call.1} parent=47 // pred_check_branch
          %326 = sbr.rel (%p324) target = $region52
        $region51: #{tpu_custom_call.1} parent=47 // pred_region
          %327 = dma.done %s320, 1024
        $region52: #{tpu_custom_call.1} parent=47 // pred_fallthru
          _
        // Predicated region
        $region53: #{tpu_custom_call.1} parent=47 // pred_check
          %p328 = pneg %p69
        $region54: #{tpu_custom_call.1} parent=47 // pred_check_branch
          %330 = sbr.rel (%p328) target = $region56
        $region55: #{tpu_custom_call.1} parent=47 // pred_region
          %331 = dma.done [#allocation7], 16
        $region56: #{tpu_custom_call.1} parent=47 // pred_fallthru
          _
        // Predicated region
        $region57: #{tpu_custom_call.1} parent=47 // pred_check
          %p332 = pneg %p90
        $region58: #{tpu_custom_call.1} parent=47 // pred_check_branch
          %334 = sbr.rel (%p332) target = $region60
        $region59: #{tpu_custom_call.1} parent=47 // pred_region
          %335 = dma.done [#allocation7], 16
        $region60: #{tpu_custom_call.1} parent=47 // pred_fallthru
          _
        // Predicated region
        $region61: #{tpu_custom_call.1} parent=47 // pred_check
          %p336 = pneg %p111
        $region62: #{tpu_custom_call.1} parent=47 // pred_check_branch
          %338 = sbr.rel (%p336) target = $region64
        $region63: #{tpu_custom_call.1} parent=47 // pred_region
          %339 = dma.done [#allocation10], 256
        $region64: #{tpu_custom_call.1} parent=47 // pred_fallthru
          _
        // Predicated region
        $region65: #{tpu_custom_call.1} parent=47 // pred_check
          %p340 = pneg %p132
        $region66: #{tpu_custom_call.1} parent=47 // pred_check_branch
          %342 = sbr.rel (%p340) target = $region68
        $region67: #{tpu_custom_call.1} parent=47 // pred_region
          %343 = dma.done [#allocation10], 256
        $region68: #{tpu_custom_call.1} parent=47 // pred_fallthru
          _
        // Predicated region
        $region69: #{tpu_custom_call.1} parent=47 // pred_check
          %p344 = pneg %p153
        $region70: #{tpu_custom_call.1} parent=47 // pred_check_branch
          %346 = sbr.rel (%p344) target = $region72
        $region71: #{tpu_custom_call.1} parent=47 // pred_region
          %347 = dma.done [#allocation13], 256
        $region72: #{tpu_custom_call.1} parent=47 // pred_fallthru
          _
        // Predicated region
        $region73: #{tpu_custom_call.1} parent=47 // pred_check
          %p348 = pneg %p174
        $region74: #{tpu_custom_call.1} parent=47 // pred_check_branch
          %350 = sbr.rel (%p348) target = $region76
        $region75: #{tpu_custom_call.1} parent=47 // pred_region
          %351 = dma.done [#allocation13], 16
        $region76: #{tpu_custom_call.1} parent=47 // pred_fallthru
          _
        %s352 = sand.u32 %s35, 1
        %s353 = scalar_lea.sflag [#allocation4], %s352
        %s354 = sand.u32 %s35, 1
        %s355 = smul.addr %s354, 64
        %s356 = scalar_lea.vmem [#allocation3], %s355
        %p357 = pneg %p48
        %p358 = pneg %p45
        %p359 = pneg %p69
        %p360 = pneg %p66
        %p361 = pneg %p90
        %p362 = pneg %p87
        %p363 = pneg %p111
        %p364 = pneg %p108
        %p365 = pneg %p132
        %p366 = pneg %p129
        %p367 = pneg %p153
        %p368 = pneg %p150
        %p369 = pneg %p174
        %p370 = pneg %p171
        %p371 = pneg %p200
        %p372 = pneg %p197
        %s373 = sand.u32 %s187, 1
        %s374 = scalar_lea.sflag [#allocation5], %s373
        %s375 = sand.u32 %s187, 1
        %s376 = smul.addr %s375, 64
        %s377 = scalar_lea.vmem [#allocation15], %s376
        %v379 = vld [vmem:[%s323] sm:$0xff]
        %v380 = vld [vmem:[%s323 + $0x8] sm:$0xff]
        %v381 = vld [vmem:[%s323 + $0x10] sm:$0xff]
        %v382 = vld [vmem:[%s323 + $0x18] sm:$0xff]
        %v383 = vld [vmem:[%s323 + $0x20] sm:$0xff]
        %v384 = vld [vmem:[%s323 + $0x28] sm:$0xff]
        %v385 = vld [vmem:[%s323 + $0x30] sm:$0xff]
        %v386 = vld [vmem:[%s323 + $0x38] sm:$0xff]
        %v387 = vld [vmem:[#allocation6] sm:$0x1]
        %v388 = vld [vmem:[#allocation8] sm:$0x1]
        %vm389 = vcmask 261120
        %v390 = vsel %vm389, %v379, 0.0
        %391 = vadd.xlane.f32.xlu0 %v390
        %v392 = vpop.xlane.xlu0 %391
        %v393 = vsel %vm389, %v380, 0.0
        %394 = vadd.xlane.f32.xlu0 %v393
        %v395 = vpop.xlane.xlu0 %394
        %v396 = vsel %vm389, %v381, 0.0
        %397 = vadd.xlane.f32.xlu0 %v396
        %v398 = vpop.xlane.xlu0 %397
        %v399 = vsel %vm389, %v382, 0.0
        %400 = vadd.xlane.f32.xlu0 %v399
        %v401 = vpop.xlane.xlu0 %400
        %v402 = vsel %vm389, %v383, 0.0
        %403 = vadd.xlane.f32.xlu0 %v402
        %v404 = vpop.xlane.xlu0 %403
        %v405 = vsel %vm389, %v384, 0.0
        %406 = vadd.xlane.f32.xlu0 %v405
        %v407 = vpop.xlane.xlu0 %406
        %v408 = vsel %vm389, %v385, 0.0
        %409 = vadd.xlane.f32.xlu0 %v408
        %v410 = vpop.xlane.xlu0 %409
        %v411 = vsel %vm389, %v386, 0.0
        %412 = vadd.xlane.f32.xlu0 %v411
        %v413 = vpop.xlane.xlu0 %412
        %v414 = vrcp.pop 32.0
        %v415 = vmul.f32 %v392, %v414
        %v416 = vmul.f32 %v395, %v414
        %v417 = vmul.f32 %v398, %v414
        %v418 = vmul.f32 %v401, %v414
        %v419 = vmul.f32 %v404, %v414
        %v420 = vmul.f32 %v407, %v414
        %v421 = vmul.f32 %v410, %v414
        %v422 = vmul.f32 %v413, %v414
        %v423 = vsub.f32 %v379, %v415
        %v424 = vsub.f32 %v380, %v416
        %v425 = vsub.f32 %v381, %v417
        %v426 = vsub.f32 %v382, %v418
        %v427 = vsub.f32 %v383, %v419
        %v428 = vsub.f32 %v384, %v420
        %v429 = vsub.f32 %v385, %v421
        %v430 = vsub.f32 %v386, %v422
        %v431 = vmul.f32 %v423, %v423
        %v432 = vmul.f32 %v424, %v424
        %v433 = vmul.f32 %v425, %v425
        %v434 = vmul.f32 %v426, %v426
        %v435 = vmul.f32 %v427, %v427
        %v436 = vmul.f32 %v428, %v428
        %v437 = vmul.f32 %v429, %v429
        %v438 = vmul.f32 %v430, %v430
        %v439 = vsel %vm389, %v431, 0.0
        %440 = vadd.xlane.f32.xlu0 %v439
        %v441 = vpop.xlane.xlu0 %440
        %v442 = vsel %vm389, %v432, 0.0
        %443 = vadd.xlane.f32.xlu0 %v442
        %v444 = vpop.xlane.xlu0 %443
        %v445 = vsel %vm389, %v433, 0.0
        %446 = vadd.xlane.f32.xlu0 %v445
        %v447 = vpop.xlane.xlu0 %446
        %v448 = vsel %vm389, %v434, 0.0
        %449 = vadd.xlane.f32.xlu0 %v448
        %v450 = vpop.xlane.xlu0 %449
        %v451 = vsel %vm389, %v435, 0.0
        %452 = vadd.xlane.f32.xlu0 %v451
        %v453 = vpop.xlane.xlu0 %452
        %v454 = vsel %vm389, %v436, 0.0
        %455 = vadd.xlane.f32.xlu0 %v454
        %v456 = vpop.xlane.xlu0 %455
        %v457 = vsel %vm389, %v437, 0.0
        %458 = vadd.xlane.f32.xlu0 %v457
        %v459 = vpop.xlane.xlu0 %458
        %v460 = vsel %vm389, %v438, 0.0
        %461 = vadd.xlane.f32.xlu0 %v460
        %v462 = vpop.xlane.xlu0 %461
        %v463 = vmul.f32 %v441, %v414
        %v464 = vmul.f32 %v444, %v414
        %v465 = vmul.f32 %v447, %v414
        %v466 = vmul.f32 %v450, %v414
        %v467 = vmul.f32 %v453, %v414
        %v468 = vmul.f32 %v456, %v414
        %v469 = vmul.f32 %v459, %v414
        %v470 = vmul.f32 %v462, %v414
        %v471 = vadd.f32 %v463, 1e-05
        %v472 = vadd.f32 %v464, 1e-05
        %v473 = vadd.f32 %v465, 1e-05
        %v474 = vadd.f32 %v466, 1e-05
        %v475 = vadd.f32 %v467, 1e-05
        %v476 = vadd.f32 %v468, 1e-05
        %v477 = vadd.f32 %v469, 1e-05
        %v478 = vadd.f32 %v470, 1e-05
        %v479 = vrsqrt.pop %v471
        %v480 = vrsqrt.pop %v472
        %v481 = vrsqrt.pop %v473
        %v482 = vrsqrt.pop %v474
        %v483 = vrsqrt.pop %v475
        %v484 = vrsqrt.pop %v476
        %v485 = vrsqrt.pop %v477
        %v486 = vrsqrt.pop %v478
        %v487 = vmul.f32 %v423, %v479
        %v488 = vmul.f32 %v424, %v480
        %v489 = vmul.f32 %v425, %v481
        %v490 = vmul.f32 %v426, %v482
        %v491 = vmul.f32 %v427, %v483
        %v492 = vmul.f32 %v428, %v484
        %v493 = vmul.f32 %v429, %v485
        %v494 = vmul.f32 %v430, %v486
        %v496 = vlaneseq
        %v497 = vshrl.u32 %v496, 7
        %v498 = vsub.s32 0, %v497
        %v499 = vrot.slane %v387, %v498
        %v501 = vmul.f32 %v487, %v499
        %v502 = vmul.f32 %v488, %v499
        %v503 = vmul.f32 %v489, %v499
        %v504 = vmul.f32 %v490, %v499
        %v505 = vmul.f32 %v491, %v499
        %v506 = vmul.f32 %v492, %v499
        %v507 = vmul.f32 %v493, %v499
        %v508 = vmul.f32 %v494, %v499
        %v510 = vlaneseq
        %v511 = vshrl.u32 %v510, 7
        %v512 = vsub.s32 0, %v511
        %v513 = vrot.slane %v388, %v512
        %v515 = vadd.f32 %v501, %v513
        %v516 = vadd.f32 %v502, %v513
        %v517 = vadd.f32 %v503, %v513
        %v518 = vadd.f32 %v504, %v513
        %v519 = vadd.f32 %v505, %v513
        %v520 = vadd.f32 %v506, %v513
        %v521 = vadd.f32 %v507, %v513
        %v522 = vadd.f32 %v508, %v513
        %v523 = vpack.c.bf16 %v516, %v515
        %v524 = vpack.c.bf16 %v518, %v517
        %v525 = vpack.c.bf16 %v520, %v519
        %v526 = vpack.c.bf16 %v522, %v521
        %v527 = vld [vmem:[#allocation9] sm:$0xf]
        %v528 = vld [vmem:[#allocation9 + $0x4] sm:$0xf]
        %v529 = vld [vmem:[#allocation9 + $0x8] sm:$0xf]
        %v530 = vld [vmem:[#allocation9 + $0xc] sm:$0xf]
        %v535 = vunpack.c.l.b16 %v527
        %v536 = vunpack.c.l.b16 %v528
        %v537 = vunpack.c.l.b16 %v529
        %v538 = vunpack.c.l.b16 %v530
        %v539 = vpack.c.b16 %v536, %v535
        %v540 = vpack.c.b16 %v538, %v537
        %v544 = vsel %vm389, %v523, 0
        %v547 = vsel %vm389, %v524, 0
        %v550 = vsel %vm389, %v525, 0
        %v553 = vsel %vm389, %v526, 0
        %555 = vmatprep.subr.bf16.mxu0 0
        %556 = vmatpush1.bf16.msra.mxu0 %v539
        %557 = vmatprep.subr.bf16.mxu0 0
        %558 = vmatpush1.bf16.msra.mxu0 %v540
        %559 = vmatprep.subr.bf16.mxu0 0
        %560 = vmatpush1.bf16.msra.mxu0 0
        %561 = vmatprep.subr.bf16.mxu0 0
        %562 = vmatpush1.bf16.msra.mxu0 0
        %563 = vmatprep.subr.bf16.mxu0 0
        %564 = vmatpush1.bf16.msra.mxu0 0
        %565 = vmatprep.subr.bf16.mxu0 0
        %566 = vmatpush1.bf16.msra.mxu0 0
        %567 = vmatprep.subr.bf16.mxu0 0
        %568 = vmatpush1.bf16.msra.mxu0 0
        %569 = vmatprep.subr.bf16.mxu0 0
        %570 = vmatpush1.bf16.msra.mxu0 0
        %571 = vmatprep.subr.bf16.mxu0 0
        %572 = vmatpush1.bf16.msra.mxu0 0
        %573 = vmatprep.subr.bf16.mxu0 0
        %574 = vmatpush1.bf16.msra.mxu0 0
        %575 = vmatprep.subr.bf16.mxu0 0
        %576 = vmatpush1.bf16.msra.mxu0 0
        %577 = vmatprep.subr.bf16.mxu0 0
        %578 = vmatpush1.bf16.msra.mxu0 0
        %579 = vmatprep.subr.bf16.mxu0 0
        %580 = vmatpush1.bf16.msra.mxu0 0
        %581 = vmatprep.subr.bf16.mxu0 0
        %582 = vmatpush1.bf16.msra.mxu0 0
        %583 = vmatprep.subr.bf16.mxu0 0
        %584 = vmatpush1.bf16.msra.mxu0 0
        %585 = vmatprep.subr.bf16.mxu0 0
        %586 = vmatpush1.bf16.msra.mxu0 0
        %587 = vmatprep.mubr.bf16.mxu0 0
        %588 = vmatmul.mubr.bf16.gmra.mrb[0].mxu0 %v544
        %v589 = vpop.f32.mrb[0].mxu0
        %v590 = vadd.f32 0.0, %v589
        %v591 = vpop.f32.mrb[0].mxu0
        %v592 = vpop.f32.mrb[0].mxu0
        %v593 = vadd.f32 0.0, %v592
        %v594 = vpop.f32.mrb[0].mxu0
        %595 = vmatprep.mubr.bf16.mxu0 0
        %596 = vmatmul.mubr.bf16.gmra.mrb[0].mxu0 %v547
        %v597 = vpop.f32.mrb[0].mxu0
        %v598 = vadd.f32 0.0, %v597
        %v599 = vpop.f32.mrb[0].mxu0
        %v600 = vpop.f32.mrb[0].mxu0
        %v601 = vadd.f32 0.0, %v600
        %v602 = vpop.f32.mrb[0].mxu0
        %603 = vmatprep.mubr.bf16.mxu0 0
        %604 = vmatmul.mubr.bf16.gmra.mrb[0].mxu0 %v550
        %v605 = vpop.f32.mrb[0].mxu0
        %v606 = vadd.f32 0.0, %v605
        %v607 = vpop.f32.mrb[0].mxu0
        %v608 = vpop.f32.mrb[0].mxu0
        %v609 = vadd.f32 0.0, %v608
        %v610 = vpop.f32.mrb[0].mxu0
        %611 = vmatprep.mubr.bf16.mxu0 0
        %612 = vmatmul.mubr.bf16.gmra.mrb[0].mxu0 %v553
        %v613 = vpop.f32.mrb[0].mxu0
        %v614 = vadd.f32 0.0, %v613
        %v615 = vpop.f32.mrb[0].mxu0
        %v616 = vpop.f32.mrb[0].mxu0
        %v617 = vadd.f32 0.0, %v616
        %v618 = vpop.f32.mrb[0].mxu0
        %619 = vdwg.mxu0
        %v620 = vmul.f32 %v590, 0.35355338
        %v621 = vmul.f32 %v593, 0.35355338
        %v622 = vmul.f32 %v598, 0.35355338
        %v623 = vmul.f32 %v601, 0.35355338
        %v624 = vmul.f32 %v606, 0.35355338
        %v625 = vmul.f32 %v609, 0.35355338
        %v626 = vmul.f32 %v614, 0.35355338
        %v627 = vmul.f32 %v617, 0.35355338
        %v628 = vld [vmem:[#allocation11] sm:$0xf]
        %v629 = vld [vmem:[#allocation11 + $0x4] sm:$0xf]
        %v630 = vld [vmem:[#allocation11 + $0x8] sm:$0xf]
        %v631 = vld [vmem:[#allocation11 + $0xc] sm:$0xf]
        %v636 = vunpack.c.l.b16 %v628
        %v637 = vunpack.c.l.b16 %v629
        %v638 = vunpack.c.l.b16 %v630
        %v639 = vunpack.c.l.b16 %v631
        %v640 = vpack.c.b16 %v637, %v636
        %v641 = vpack.c.b16 %v639, %v638
        %644 = vmatprep.subr.bf16.mxu0 0
        %645 = vmatpush1.bf16.msra.mxu0 %v640
        %646 = vmatprep.subr.bf16.mxu0 0
        %647 = vmatpush1.bf16.msra.mxu0 %v641
        %648 = vmatprep.subr.bf16.mxu0 0
        %649 = vmatpush1.bf16.msra.mxu0 0
        %650 = vmatprep.subr.bf16.mxu0 0
        %651 = vmatpush1.bf16.msra.mxu0 0
        %652 = vmatprep.subr.bf16.mxu0 0
        %653 = vmatpush1.bf16.msra.mxu0 0
        %654 = vmatprep.subr.bf16.mxu0 0
        %655 = vmatpush1.bf16.msra.mxu0 0
        %656 = vmatprep.subr.bf16.mxu0 0
        %657 = vmatpush1.bf16.msra.mxu0 0
        %658 = vmatprep.subr.bf16.mxu0 0
        %659 = vmatpush1.bf16.msra.mxu0 0
        %660 = vmatprep.subr.bf16.mxu0 0
        %661 = vmatpush1.bf16.msra.mxu0 0
        %662 = vmatprep.subr.bf16.mxu0 0
        %663 = vmatpush1.bf16.msra.mxu0 0
        %664 = vmatprep.subr.bf16.mxu0 0
        %665 = vmatpush1.bf16.msra.mxu0 0
        %666 = vmatprep.subr.bf16.mxu0 0
        %667 = vmatpush1.bf16.msra.mxu0 0
        %668 = vmatprep.subr.bf16.mxu0 0
        %669 = vmatpush1.bf16.msra.mxu0 0
        %670 = vmatprep.subr.bf16.mxu0 0
        %671 = vmatpush1.bf16.msra.mxu0 0
        %672 = vmatprep.subr.bf16.mxu0 0
        %673 = vmatpush1.bf16.msra.mxu0 0
        %674 = vmatprep.subr.bf16.mxu0 0
        %675 = vmatpush1.bf16.msra.mxu0 0
        %676 = vmatprep.mubr.bf16.mxu0 0
        %677 = vmatmul.mubr.bf16.gmra.mrb[0].mxu0 %v544
        %v678 = vpop.f32.mrb[0].mxu0
        %v679 = vadd.f32 0.0, %v678
        %v680 = vpop.f32.mrb[0].mxu0
        %v681 = vpop.f32.mrb[0].mxu0
        %v682 = vadd.f32 0.0, %v681
        %v683 = vpop.f32.mrb[0].mxu0
        %684 = vmatprep.mubr.bf16.mxu0 0
        %685 = vmatmul.mubr.bf16.gmra.mrb[0].mxu0 %v547
        %v686 = vpop.f32.mrb[0].mxu0
        %v687 = vadd.f32 0.0, %v686
        %v688 = vpop.f32.mrb[0].mxu0
        %v689 = vpop.f32.mrb[0].mxu0
        %v690 = vadd.f32 0.0, %v689
        %v691 = vpop.f32.mrb[0].mxu0
        %692 = vmatprep.mubr.bf16.mxu0 0
        %693 = vmatmul.mubr.bf16.gmra.mrb[0].mxu0 %v550
        %v694 = vpop.f32.mrb[0].mxu0
        %v695 = vadd.f32 0.0, %v694
        %v696 = vpop.f32.mrb[0].mxu0
        %v697 = vpop.f32.mrb[0].mxu0
        %v698 = vadd.f32 0.0, %v697
        %v699 = vpop.f32.mrb[0].mxu0
        %700 = vmatprep.mubr.bf16.mxu0 0
        %701 = vmatmul.mubr.bf16.gmra.mrb[0].mxu0 %v553
        %v702 = vpop.f32.mrb[0].mxu0
        %v703 = vadd.f32 0.0, %v702
        %v704 = vpop.f32.mrb[0].mxu0
        %v705 = vpop.f32.mrb[0].mxu0
        %v706 = vadd.f32 0.0, %v705
        %v707 = vpop.f32.mrb[0].mxu0
        %708 = vdwg.mxu0
        %v709 = vpack.c.bf16 %v621, %v620
        %v710 = vpack.c.bf16 %v623, %v622
        %v711 = vpack.c.bf16 %v625, %v624
        %v712 = vpack.c.bf16 %v627, %v626
        %v713 = vpack.c.bf16 %v682, %v679
        %v714 = vpack.c.bf16 %v690, %v687
        %v715 = vpack.c.bf16 %v698, %v695
        %v716 = vpack.c.bf16 %v706, %v703
        %vm717 = vcmask 64512
        %v719 = vsel %vm717, %v709, 0
        %v722 = vsel %vm717, %v710, 0
        %v725 = vsel %vm717, %v711, 0
        %v728 = vsel %vm717, %v712, 0
        %v731 = vsel %vm717, %v713, 0
        %v734 = vsel %vm717, %v714, 0
        %v737 = vsel %vm717, %v715, 0
        %v740 = vsel %vm717, %v716, 0
        %742 = vmatprep.subr.bf16.mxu0 0
        %743 = vmatpush1.bf16.xpose.msra.mxu0 %v731
        %744 = vmatprep.subr.bf16.mxu0 0
        %745 = vmatpush1.bf16.xpose.msra.mxu0 %v734
        %746 = vmatprep.subr.bf16.mxu0 0
        %747 = vmatpush1.bf16.xpose.msra.mxu0 %v737
        %748 = vmatprep.subr.bf16.mxu0 0
        %749 = vmatpush1.bf16.xpose.msra.mxu0 %v740
        %750 = vmatprep.subr.bf16.mxu0 0
        %751 = vmatpush1.bf16.xpose.msra.mxu0 0
        %752 = vmatprep.subr.bf16.mxu0 0
        %753 = vmatpush1.bf16.xpose.msra.mxu0 0
        %754 = vmatprep.subr.bf16.mxu0 0
        %755 = vmatpush1.bf16.xpose.msra.mxu0 0
        %756 = vmatprep.subr.bf16.mxu0 0
        %757 = vmatpush1.bf16.xpose.msra.mxu0 0
        %758 = vmatprep.subr.bf16.mxu0 0
        %759 = vmatpush1.bf16.xpose.msra.mxu0 0
        %760 = vmatprep.subr.bf16.mxu0 0
        %761 = vmatpush1.bf16.xpose.msra.mxu0 0
        %762 = vmatprep.subr.bf16.mxu0 0
        %763 = vmatpush1.bf16.xpose.msra.mxu0 0
        %764 = vmatprep.subr.bf16.mxu0 0
        %765 = vmatpush1.bf16.xpose.msra.mxu0 0
        %766 = vmatprep.subr.bf16.mxu0 0
        %767 = vmatpush1.bf16.xpose.msra.mxu0 0
        %768 = vmatprep.subr.bf16.mxu0 0
        %769 = vmatpush1.bf16.xpose.msra.mxu0 0
        %770 = vmatprep.subr.bf16.mxu0 0
        %771 = vmatpush1.bf16.xpose.msra.mxu0 0
        %772 = vmatprep.subr.bf16.mxu0 0
        %773 = vmatpush1.bf16.xpose.msra.mxu0 0
        %774 = vmatprep.mubr.bf16.mxu0 0
        %775 = vmatmul.mubr.bf16.gmra.mrb[0].mxu0 %v719
        %v776 = vpop.f32.mrb[0].mxu0
        %v777 = vadd.f32 0.0, %v776
        %v778 = vpop.f32.mrb[0].mxu0
        %v779 = vpop.f32.mrb[0].mxu0
        %v780 = vadd.f32 0.0, %v779
        %v781 = vpop.f32.mrb[0].mxu0
        %782 = vmatprep.mubr.bf16.mxu0 0
        %783 = vmatmul.mubr.bf16.gmra.mrb[0].mxu0 %v722
        %v784 = vpop.f32.mrb[0].mxu0
        %v785 = vadd.f32 0.0, %v784
        %v786 = vpop.f32.mrb[0].mxu0
        %v787 = vpop.f32.mrb[0].mxu0
        %v788 = vadd.f32 0.0, %v787
        %v789 = vpop.f32.mrb[0].mxu0
        %790 = vmatprep.mubr.bf16.mxu0 0
        %791 = vmatmul.mubr.bf16.gmra.mrb[0].mxu0 %v725
        %v792 = vpop.f32.mrb[0].mxu0
        %v793 = vadd.f32 0.0, %v792
        %v794 = vpop.f32.mrb[0].mxu0
        %v795 = vpop.f32.mrb[0].mxu0
        %v796 = vadd.f32 0.0, %v795
        %v797 = vpop.f32.mrb[0].mxu0
        %798 = vmatprep.mubr.bf16.mxu0 0
        %799 = vmatmul.mubr.bf16.gmra.mrb[0].mxu0 %v728
        %v800 = vpop.f32.mrb[0].mxu0
        %v801 = vadd.f32 0.0, %v800
        %v802 = vpop.f32.mrb[0].mxu0
        %v803 = vpop.f32.mrb[0].mxu0
        %v804 = vadd.f32 0.0, %v803
        %v805 = vpop.f32.mrb[0].mxu0
        %806 = vdwg.mxu0
        %vm807 = vcmask 523264
        %v808 = vsel %vm807, %v777, -inf
        %809 = vmax.xlane.f32.xlu0 %v808
        %v810 = vpop.xlane.xlu0 %809
        %v811 = vsel %vm807, %v780, -inf
        %812 = vmax.xlane.f32.xlu0 %v811
        %v813 = vpop.xlane.xlu0 %812
        %v814 = vsel %vm807, %v785, -inf
        %815 = vmax.xlane.f32.xlu0 %v814
        %v816 = vpop.xlane.xlu0 %815
        %v817 = vsel %vm807, %v788, -inf
        %818 = vmax.xlane.f32.xlu0 %v817
        %v819 = vpop.xlane.xlu0 %818
        %v820 = vsel %vm807, %v793, -inf
        %821 = vmax.xlane.f32.xlu0 %v820
        %v822 = vpop.xlane.xlu0 %821
        %v823 = vsel %vm807, %v796, -inf
        %824 = vmax.xlane.f32.xlu0 %v823
        %v825 = vpop.xlane.xlu0 %824
        %v826 = vsel %vm807, %v801, -inf
        %827 = vmax.xlane.f32.xlu0 %v826
        %v828 = vpop.xlane.xlu0 %827
        %v829 = vsel %vm807, %v804, -inf
        %830 = vmax.xlane.f32.xlu0 %v829
        %v831 = vpop.xlane.xlu0 %830
        %v832 = vsub.f32 %v777, %v810
        %v833 = vsub.f32 %v780, %v813
        %v834 = vsub.f32 %v785, %v816
        %v835 = vsub.f32 %v788, %v819
        %v836 = vsub.f32 %v793, %v822
        %v837 = vsub.f32 %v796, %v825
        %v838 = vsub.f32 %v801, %v828
        %v839 = vsub.f32 %v804, %v831
        %v840 = vmul.f32 %v832, 1.442695
        %v841 = vpow.pop %v840
        %v842 = vmul.f32 %v833, 1.442695
        %v843 = vpow.pop %v842
        %v844 = vmul.f32 %v834, 1.442695
        %v845 = vpow.pop %v844
        %v846 = vmul.f32 %v835, 1.442695
        %v847 = vpow.pop %v846
        %v848 = vmul.f32 %v836, 1.442695
        %v849 = vpow.pop %v848
        %v850 = vmul.f32 %v837, 1.442695
        %v851 = vpow.pop %v850
        %v852 = vmul.f32 %v838, 1.442695
        %v853 = vpow.pop %v852
        %v854 = vmul.f32 %v839, 1.442695
        %v855 = vpow.pop %v854
        %v856 = vsel %vm807, %v841, 0.0
        %857 = vadd.xlane.f32.xlu0 %v856
        %v858 = vpop.xlane.xlu0 %857
        %v859 = vsel %vm807, %v843, 0.0
        %860 = vadd.xlane.f32.xlu0 %v859
        %v861 = vpop.xlane.xlu0 %860
        %v862 = vsel %vm807, %v845, 0.0
        %863 = vadd.xlane.f32.xlu0 %v862
        %v864 = vpop.xlane.xlu0 %863
        %v865 = vsel %vm807, %v847, 0.0
        %866 = vadd.xlane.f32.xlu0 %v865
        %v867 = vpop.xlane.xlu0 %866
        %v868 = vsel %vm807, %v849, 0.0
        %869 = vadd.xlane.f32.xlu0 %v868
        %v870 = vpop.xlane.xlu0 %869
        %v871 = vsel %vm807, %v851, 0.0
        %872 = vadd.xlane.f32.xlu0 %v871
        %v873 = vpop.xlane.xlu0 %872
        %v874 = vsel %vm807, %v853, 0.0
        %875 = vadd.xlane.f32.xlu0 %v874
        %v876 = vpop.xlane.xlu0 %875
        %v877 = vsel %vm807, %v855, 0.0
        %878 = vadd.xlane.f32.xlu0 %v877
        %v879 = vpop.xlane.xlu0 %878
        %v880 = vrcp.pop %v858
        %v881 = vrcp.pop %v861
        %v882 = vrcp.pop %v864
        %v883 = vrcp.pop %v867
        %v884 = vrcp.pop %v870
        %v885 = vrcp.pop %v873
        %v886 = vrcp.pop %v876
        %v887 = vrcp.pop %v879
        %v888 = vmul.f32 %v841, %v880
        %v889 = vmul.f32 %v843, %v881
        %v890 = vmul.f32 %v845, %v882
        %v891 = vmul.f32 %v847, %v883
        %v892 = vmul.f32 %v849, %v884
        %v893 = vmul.f32 %v851, %v885
        %v894 = vmul.f32 %v853, %v886
        %v895 = vmul.f32 %v855, %v887
        %v896 = vpack.c.bf16 %v889, %v888
        %v897 = vpack.c.bf16 %v891, %v890
        %v898 = vpack.c.bf16 %v893, %v892
        %v899 = vpack.c.bf16 %v895, %v894
        %904 = vrot.lane.b32.xlu0 %v713, 96
        %v905 = vpop.permute.xlu0 %904
        %906 = vrot.lane.b32.xlu0 %v714, 96
        %v907 = vpop.permute.xlu0 %906
        %908 = vrot.lane.b32.xlu0 %v715, 96
        %v909 = vpop.permute.xlu0 %908
        %910 = vrot.lane.b32.xlu0 %v716, 96
        %v911 = vpop.permute.xlu0 %910
        %v917 = vsel %vm807, %v896, 0
        %v920 = vsel %vm807, %v897, 0
        %v923 = vsel %vm807, %v898, 0
        %v926 = vsel %vm807, %v899, 0
        %928 = vmatprep.subr.bf16.mxu0 0
        %929 = vmatpush1.bf16.msra.mxu0 %v905
        %930 = vmatprep.subr.bf16.mxu0 0
        %931 = vmatpush1.bf16.msra.mxu0 %v907
        %932 = vmatprep.subr.bf16.mxu0 0
        %933 = vmatpush1.bf16.msra.mxu0 %v909
        %934 = vmatprep.subr.bf16.mxu0 0
        %935 = vmatpush1.bf16.msra.mxu0 %v911
        %936 = vmatprep.subr.bf16.mxu0 0
        %937 = vmatpush1.bf16.msra.mxu0 0
        %938 = vmatprep.subr.bf16.mxu0 0
        %939 = vmatpush1.bf16.msra.mxu0 0
        %940 = vmatprep.subr.bf16.mxu0 0
        %941 = vmatpush1.bf16.msra.mxu0 0
        %942 = vmatprep.subr.bf16.mxu0 0
        %943 = vmatpush1.bf16.msra.mxu0 0
        %944 = vmatprep.subr.bf16.mxu0 0
        %945 = vmatpush1.bf16.msra.mxu0 0
        %946 = vmatprep.subr.bf16.mxu0 0
        %947 = vmatpush1.bf16.msra.mxu0 0
        %948 = vmatprep.subr.bf16.mxu0 0
        %949 = vmatpush1.bf16.msra.mxu0 0
        %950 = vmatprep.subr.bf16.mxu0 0
        %951 = vmatpush1.bf16.msra.mxu0 0
        %952 = vmatprep.subr.bf16.mxu0 0
        %953 = vmatpush1.bf16.msra.mxu0 0
        %954 = vmatprep.subr.bf16.mxu0 0
        %955 = vmatpush1.bf16.msra.mxu0 0
        %956 = vmatprep.subr.bf16.mxu0 0
        %957 = vmatpush1.bf16.msra.mxu0 0
        %958 = vmatprep.subr.bf16.mxu0 0
        %959 = vmatpush1.bf16.msra.mxu0 0
        %960 = vmatprep.mubr.bf16.mxu0 0
        %961 = vmatmul.mubr.bf16.gmra.mrb[0].mxu0 %v917
        %v962 = vpop.f32.mrb[0].mxu0
        %v963 = vadd.f32 0.0, %v962
        %v964 = vpop.f32.mrb[0].mxu0
        %v965 = vpop.f32.mrb[0].mxu0
        %v966 = vadd.f32 0.0, %v965
        %v967 = vpop.f32.mrb[0].mxu0
        %968 = vmatprep.mubr.bf16.mxu0 0
        %969 = vmatmul.mubr.bf16.gmra.mrb[0].mxu0 %v920
        %v970 = vpop.f32.mrb[0].mxu0
        %v971 = vadd.f32 0.0, %v970
        %v972 = vpop.f32.mrb[0].mxu0
        %v973 = vpop.f32.mrb[0].mxu0
        %v974 = vadd.f32 0.0, %v973
        %v975 = vpop.f32.mrb[0].mxu0
        %976 = vmatprep.mubr.bf16.mxu0 0
        %977 = vmatmul.mubr.bf16.gmra.mrb[0].mxu0 %v923
        %v978 = vpop.f32.mrb[0].mxu0
        %v979 = vadd.f32 0.0, %v978
        %v980 = vpop.f32.mrb[0].mxu0
        %v981 = vpop.f32.mrb[0].mxu0
        %v982 = vadd.f32 0.0, %v981
        %v983 = vpop.f32.mrb[0].mxu0
        %984 = vmatprep.mubr.bf16.mxu0 0
        %985 = vmatmul.mubr.bf16.gmra.mrb[0].mxu0 %v926
        %v986 = vpop.f32.mrb[0].mxu0
        %v987 = vadd.f32 0.0, %v986
        %v988 = vpop.f32.mrb[0].mxu0
        %v989 = vpop.f32.mrb[0].mxu0
        %v990 = vadd.f32 0.0, %v989
        %v991 = vpop.f32.mrb[0].mxu0
        %992 = vdwg.mxu0
        %993 = vst.msk [vmem:[#allocation2] sm:$0xff] %vm717, %v963
        %994 = vst.msk [vmem:[#allocation2 + $0x8] sm:$0xff] %vm717, %v966
        %995 = vst.msk [vmem:[#allocation2 + $0x10] sm:$0xff] %vm717, %v971
        %996 = vst.msk [vmem:[#allocation2 + $0x18] sm:$0xff] %vm717, %v974
        %997 = vst.msk [vmem:[#allocation2 + $0x20] sm:$0xff] %vm717, %v979
        %998 = vst.msk [vmem:[#allocation2 + $0x28] sm:$0xff] %vm717, %v982
        %999 = vst.msk [vmem:[#allocation2 + $0x30] sm:$0xff] %vm717, %v987
        %1000 = vst.msk [vmem:[#allocation2 + $0x38] sm:$0xff] %vm717, %v990
        %1005 = vrot.lane.b32.xlu0 %v709, 120
        %v1006 = vpop.permute.xlu0 %1005
        %1007 = vrot.lane.b32.xlu0 %v710, 120
        %v1008 = vpop.permute.xlu0 %1007
        %1009 = vrot.lane.b32.xlu0 %v711, 120
        %v1010 = vpop.permute.xlu0 %1009
        %1011 = vrot.lane.b32.xlu0 %v712, 120
        %v1012 = vpop.permute.xlu0 %1011
        %1013 = vrot.lane.b32.xlu0 %v713, 120
        %v1014 = vpop.permute.xlu0 %1013
        %1015 = vrot.lane.b32.xlu0 %v714, 120
        %v1016 = vpop.permute.xlu0 %1015
        %1017 = vrot.lane.b32.xlu0 %v715, 120
        %v1018 = vpop.permute.xlu0 %1017
        %1019 = vrot.lane.b32.xlu0 %v716, 120
        %v1020 = vpop.permute.xlu0 %1019
        %v1022 = vsel %vm717, %v1006, 0
        %v1025 = vsel %vm717, %v1008, 0
        %v1028 = vsel %vm717, %v1010, 0
        %v1031 = vsel %vm717, %v1012, 0
        %v1034 = vsel %vm717, %v1014, 0
        %v1037 = vsel %vm717, %v1016, 0
        %v1040 = vsel %vm717, %v1018, 0
        %v1043 = vsel %vm717, %v1020, 0
        %1045 = vmatprep.subr.bf16.mxu0 0
        %1046 = vmatpush1.bf16.xpose.msra.mxu0 %v1034
        %1047 = vmatprep.subr.bf16.mxu0 0
        %1048 = vmatpush1.bf16.xpose.msra.mxu0 %v1037
        %1049 = vmatprep.subr.bf16.mxu0 0
        %1050 = vmatpush1.bf16.xpose.msra.mxu0 %v1040
        %1051 = vmatprep.subr.bf16.mxu0 0
        %1052 = vmatpush1.bf16.xpose.msra.mxu0 %v1043
        %1053 = vmatprep.subr.bf16.mxu0 0
        %1054 = vmatpush1.bf16.xpose.msra.mxu0 0
        %1055 = vmatprep.subr.bf16.mxu0 0
        %1056 = vmatpush1.bf16.xpose.msra.mxu0 0
        %1057 = vmatprep.subr.bf16.mxu0 0
        %1058 = vmatpush1.bf16.xpose.msra.mxu0 0
        %1059 = vmatprep.subr.bf16.mxu0 0
        %1060 = vmatpush1.bf16.xpose.msra.mxu0 0
        %1061 = vmatprep.subr.bf16.mxu0 0
        %1062 = vmatpush1.bf16.xpose.msra.mxu0 0
        %1063 = vmatprep.subr.bf16.mxu0 0
        %1064 = vmatpush1.bf16.xpose.msra.mxu0 0
        %1065 = vmatprep.subr.bf16.mxu0 0
        %1066 = vmatpush1.bf16.xpose.msra.mxu0 0
        %1067 = vmatprep.subr.bf16.mxu0 0
        %1068 = vmatpush1.bf16.xpose.msra.mxu0 0
        %1069 = vmatprep.subr.bf16.mxu0 0
        %1070 = vmatpush1.bf16.xpose.msra.mxu0 0
        %1071 = vmatprep.subr.bf16.mxu0 0
        %1072 = vmatpush1.bf16.xpose.msra.mxu0 0
        %1073 = vmatprep.subr.bf16.mxu0 0
        %1074 = vmatpush1.bf16.xpose.msra.mxu0 0
        %1075 = vmatprep.subr.bf16.mxu0 0
        %1076 = vmatpush1.bf16.xpose.msra.mxu0 0
        %1077 = vmatprep.mubr.bf16.mxu0 0
        %1078 = vmatmul.mubr.bf16.gmra.mrb[0].mxu0 %v1022
        %v1079 = vpop.f32.mrb[0].mxu0
        %v1080 = vadd.f32 0.0, %v1079
        %v1081 = vpop.f32.mrb[0].mxu0
        %v1082 = vpop.f32.mrb[0].mxu0
        %v1083 = vadd.f32 0.0, %v1082
        %v1084 = vpop.f32.mrb[0].mxu0
        %1085 = vmatprep.mubr.bf16.mxu0 0
        %1086 = vmatmul.mubr.bf16.gmra.mrb[0].mxu0 %v1025
        %v1087 = vpop.f32.mrb[0].mxu0
        %v1088 = vadd.f32 0.0, %v1087
        %v1089 = vpop.f32.mrb[0].mxu0
        %v1090 = vpop.f32.mrb[0].mxu0
        %v1091 = vadd.f32 0.0, %v1090
        %v1092 = vpop.f32.mrb[0].mxu0
        %1093 = vmatprep.mubr.bf16.mxu0 0
        %1094 = vmatmul.mubr.bf16.gmra.mrb[0].mxu0 %v1028
        %v1095 = vpop.f32.mrb[0].mxu0
        %v1096 = vadd.f32 0.0, %v1095
        %v1097 = vpop.f32.mrb[0].mxu0
        %v1098 = vpop.f32.mrb[0].mxu0
        %v1099 = vadd.f32 0.0, %v1098
        %v1100 = vpop.f32.mrb[0].mxu0
        %1101 = vmatprep.mubr.bf16.mxu0 0
        %1102 = vmatmul.mubr.bf16.gmra.mrb[0].mxu0 %v1031
        %v1103 = vpop.f32.mrb[0].mxu0
        %v1104 = vadd.f32 0.0, %v1103
        %v1105 = vpop.f32.mrb[0].mxu0
        %v1106 = vpop.f32.mrb[0].mxu0
        %v1107 = vadd.f32 0.0, %v1106
        %v1108 = vpop.f32.mrb[0].mxu0
        %1109 = vdwg.mxu0
        %v1110 = vsel %vm807, %v1080, -inf
        %1111 = vmax.xlane.f32.xlu0 %v1110
        %v1112 = vpop.xlane.xlu0 %1111
        %v1113 = vsel %vm807, %v1083, -inf
        %1114 = vmax.xlane.f32.xlu0 %v1113
        %v1115 = vpop.xlane.xlu0 %1114
        %v1116 = vsel %vm807, %v1088, -inf
        %1117 = vmax.xlane.f32.xlu0 %v1116
        %v1118 = vpop.xlane.xlu0 %1117
        %v1119 = vsel %vm807, %v1091, -inf
        %1120 = vmax.xlane.f32.xlu0 %v1119
        %v1121 = vpop.xlane.xlu0 %1120
        %v1122 = vsel %vm807, %v1096, -inf
        %1123 = vmax.xlane.f32.xlu0 %v1122
        %v1124 = vpop.xlane.xlu0 %1123
        %v1125 = vsel %vm807, %v1099, -inf
        %1126 = vmax.xlane.f32.xlu0 %v1125
        %v1127 = vpop.xlane.xlu0 %1126
        %v1128 = vsel %vm807, %v1104, -inf
        %1129 = vmax.xlane.f32.xlu0 %v1128
        %v1130 = vpop.xlane.xlu0 %1129
        %v1131 = vsel %vm807, %v1107, -inf
        %1132 = vmax.xlane.f32.xlu0 %v1131
        %v1133 = vpop.xlane.xlu0 %1132
        %v1134 = vsub.f32 %v1080, %v1112
        %v1135 = vsub.f32 %v1083, %v1115
        %v1136 = vsub.f32 %v1088, %v1118
        %v1137 = vsub.f32 %v1091, %v1121
        %v1138 = vsub.f32 %v1096, %v1124
        %v1139 = vsub.f32 %v1099, %v1127
        %v1140 = vsub.f32 %v1104, %v1130
        %v1141 = vsub.f32 %v1107, %v1133
        %v1142 = vmul.f32 %v1134, 1.442695
        %v1143 = vpow.pop %v1142
        %v1144 = vmul.f32 %v1135, 1.442695
        %v1145 = vpow.pop %v1144
        %v1146 = vmul.f32 %v1136, 1.442695
        %v1147 = vpow.pop %v1146
        %v1148 = vmul.f32 %v1137, 1.442695
        %v1149 = vpow.pop %v1148
        %v1150 = vmul.f32 %v1138, 1.442695
        %v1151 = vpow.pop %v1150
        %v1152 = vmul.f32 %v1139, 1.442695
        %v1153 = vpow.pop %v1152
        %v1154 = vmul.f32 %v1140, 1.442695
        %v1155 = vpow.pop %v1154
        %v1156 = vmul.f32 %v1141, 1.442695
        %v1157 = vpow.pop %v1156
        %v1158 = vsel %vm807, %v1143, 0.0
        %1159 = vadd.xlane.f32.xlu0 %v1158
        %v1160 = vpop.xlane.xlu0 %1159
        %v1161 = vsel %vm807, %v1145, 0.0
        %1162 = vadd.xlane.f32.xlu0 %v1161
        %v1163 = vpop.xlane.xlu0 %1162
        %v1164 = vsel %vm807, %v1147, 0.0
        %1165 = vadd.xlane.f32.xlu0 %v1164
        %v1166 = vpop.xlane.xlu0 %1165
        %v1167 = vsel %vm807, %v1149, 0.0
        %1168 = vadd.xlane.f32.xlu0 %v1167
        %v1169 = vpop.xlane.xlu0 %1168
        %v1170 = vsel %vm807, %v1151, 0.0
        %1171 = vadd.xlane.f32.xlu0 %v1170
        %v1172 = vpop.xlane.xlu0 %1171
        %v1173 = vsel %vm807, %v1153, 0.0
        %1174 = vadd.xlane.f32.xlu0 %v1173
        %v1175 = vpop.xlane.xlu0 %1174
        %v1176 = vsel %vm807, %v1155, 0.0
        %1177 = vadd.xlane.f32.xlu0 %v1176
        %v1178 = vpop.xlane.xlu0 %1177
        %v1179 = vsel %vm807, %v1157, 0.0
        %1180 = vadd.xlane.f32.xlu0 %v1179
        %v1181 = vpop.xlane.xlu0 %1180
        %v1182 = vrcp.pop %v1160
        %v1183 = vrcp.pop %v1163
        %v1184 = vrcp.pop %v1166
        %v1185 = vrcp.pop %v1169
        %v1186 = vrcp.pop %v1172
        %v1187 = vrcp.pop %v1175
        %v1188 = vrcp.pop %v1178
        %v1189 = vrcp.pop %v1181
        %v1190 = vmul.f32 %v1143, %v1182
        %v1191 = vmul.f32 %v1145, %v1183
        %v1192 = vmul.f32 %v1147, %v1184
        %v1193 = vmul.f32 %v1149, %v1185
        %v1194 = vmul.f32 %v1151, %v1186
        %v1195 = vmul.f32 %v1153, %v1187
        %v1196 = vmul.f32 %v1155, %v1188
        %v1197 = vmul.f32 %v1157, %v1189
        %v1198 = vpack.c.bf16 %v1191, %v1190
        %v1199 = vpack.c.bf16 %v1193, %v1192
        %v1200 = vpack.c.bf16 %v1195, %v1194
        %v1201 = vpack.c.bf16 %v1197, %v1196
        %1202 = vrot.lane.b32.xlu0 %v713, 88
        %v1203 = vpop.permute.xlu0 %1202
        %1204 = vrot.lane.b32.xlu0 %v714, 88
        %v1205 = vpop.permute.xlu0 %1204
        %1206 = vrot.lane.b32.xlu0 %v715, 88
        %v1207 = vpop.permute.xlu0 %1206
        %1208 = vrot.lane.b32.xlu0 %v716, 88
        %v1209 = vpop.permute.xlu0 %1208
        %v1215 = vsel %vm807, %v1198, 0
        %v1218 = vsel %vm807, %v1199, 0
        %v1221 = vsel %vm807, %v1200, 0
        %v1224 = vsel %vm807, %v1201, 0
        %1226 = vmatprep.subr.bf16.mxu0 0
        %1227 = vmatpush1.bf16.msra.mxu0 %v1203
        %1228 = vmatprep.subr.bf16.mxu0 0
        %1229 = vmatpush1.bf16.msra.mxu0 %v1205
        %1230 = vmatprep.subr.bf16.mxu0 0
        %1231 = vmatpush1.bf16.msra.mxu0 %v1207
        %1232 = vmatprep.subr.bf16.mxu0 0
        %1233 = vmatpush1.bf16.msra.mxu0 %v1209
        %1234 = vmatprep.subr.bf16.mxu0 0
        %1235 = vmatpush1.bf16.msra.mxu0 0
        %1236 = vmatprep.subr.bf16.mxu0 0
        %1237 = vmatpush1.bf16.msra.mxu0 0
        %1238 = vmatprep.subr.bf16.mxu0 0
        %1239 = vmatpush1.bf16.msra.mxu0 0
        %1240 = vmatprep.subr.bf16.mxu0 0
        %1241 = vmatpush1.bf16.msra.mxu0 0
        %1242 = vmatprep.subr.bf16.mxu0 0
        %1243 = vmatpush1.bf16.msra.mxu0 0
        %1244 = vmatprep.subr.bf16.mxu0 0
        %1245 = vmatpush1.bf16.msra.mxu0 0
        %1246 = vmatprep.subr.bf16.mxu0 0
        %1247 = vmatpush1.bf16.msra.mxu0 0
        %1248 = vmatprep.subr.bf16.mxu0 0
        %1249 = vmatpush1.bf16.msra.mxu0 0
        %1250 = vmatprep.subr.bf16.mxu0 0
        %1251 = vmatpush1.bf16.msra.mxu0 0
        %1252 = vmatprep.subr.bf16.mxu0 0
        %1253 = vmatpush1.bf16.msra.mxu0 0
        %1254 = vmatprep.subr.bf16.mxu0 0
        %1255 = vmatpush1.bf16.msra.mxu0 0
        %1256 = vmatprep.subr.bf16.mxu0 0
        %1257 = vmatpush1.bf16.msra.mxu0 0
        %1258 = vmatprep.mubr.bf16.mxu0 0
        %1259 = vmatmul.mubr.bf16.gmra.mrb[0].mxu0 %v1215
        %v1260 = vpop.f32.mrb[0].mxu0
        %v1261 = vadd.f32 0.0, %v1260
        %v1262 = vpop.f32.mrb[0].mxu0
        %v1263 = vpop.f32.mrb[0].mxu0
        %v1264 = vadd.f32 0.0, %v1263
        %v1265 = vpop.f32.mrb[0].mxu0
        %1266 = vmatprep.mubr.bf16.mxu0 0
        %1267 = vmatmul.mubr.bf16.gmra.mrb[0].mxu0 %v1218
        %v1268 = vpop.f32.mrb[0].mxu0
        %v1269 = vadd.f32 0.0, %v1268
        %v1270 = vpop.f32.mrb[0].mxu0
        %v1271 = vpop.f32.mrb[0].mxu0
        %v1272 = vadd.f32 0.0, %v1271
        %v1273 = vpop.f32.mrb[0].mxu0
        %1274 = vmatprep.mubr.bf16.mxu0 0
        %1275 = vmatmul.mubr.bf16.gmra.mrb[0].mxu0 %v1221
        %v1276 = vpop.f32.mrb[0].mxu0
        %v1277 = vadd.f32 0.0, %v1276
        %v1278 = vpop.f32.mrb[0].mxu0
        %v1279 = vpop.f32.mrb[0].mxu0
        %v1280 = vadd.f32 0.0, %v1279
        %v1281 = vpop.f32.mrb[0].mxu0
        %1282 = vmatprep.mubr.bf16.mxu0 0
        %1283 = vmatmul.mubr.bf16.gmra.mrb[0].mxu0 %v1224
        %v1284 = vpop.f32.mrb[0].mxu0
        %v1285 = vadd.f32 0.0, %v1284
        %v1286 = vpop.f32.mrb[0].mxu0
        %v1287 = vpop.f32.mrb[0].mxu0
        %v1288 = vadd.f32 0.0, %v1287
        %v1289 = vpop.f32.mrb[0].mxu0
        %1290 = vdwg.mxu0
        %1299 = vrot.lane.b32.xlu0 %v1261, 8
        %v1300 = vpop.permute.xlu0 %1299
        %1301 = vrot.lane.b32.xlu0 %v1264, 8
        %v1302 = vpop.permute.xlu0 %1301
        %1303 = vrot.lane.b32.xlu0 %v1269, 8
        %v1304 = vpop.permute.xlu0 %1303
        %1305 = vrot.lane.b32.xlu0 %v1272, 8
        %v1306 = vpop.permute.xlu0 %1305
        %1307 = vrot.lane.b32.xlu0 %v1277, 8
        %v1308 = vpop.permute.xlu0 %1307
        %1309 = vrot.lane.b32.xlu0 %v1280, 8
        %v1310 = vpop.permute.xlu0 %1309
        %1311 = vrot.lane.b32.xlu0 %v1285, 8
        %v1312 = vpop.permute.xlu0 %1311
        %1313 = vrot.lane.b32.xlu0 %v1288, 8
        %v1314 = vpop.permute.xlu0 %1313
        %vm1323 = vcmask 130112
        %1324 = vst.msk [vmem:[#allocation2] sm:$0xff] %vm1323, %v1300
        %1325 = vst.msk [vmem:[#allocation2 + $0x8] sm:$0xff] %vm1323, %v1302
        %1326 = vst.msk [vmem:[#allocation2 + $0x10] sm:$0xff] %vm1323, %v1304
        %1327 = vst.msk [vmem:[#allocation2 + $0x18] sm:$0xff] %vm1323, %v1306
        %1328 = vst.msk [vmem:[#allocation2 + $0x20] sm:$0xff] %vm1323, %v1308
        %1329 = vst.msk [vmem:[#allocation2 + $0x28] sm:$0xff] %vm1323, %v1310
        %1330 = vst.msk [vmem:[#allocation2 + $0x30] sm:$0xff] %vm1323, %v1312
        %1331 = vst.msk [vmem:[#allocation2 + $0x38] sm:$0xff] %vm1323, %v1314
        %1332 = vrot.lane.b32.xlu0 %v709, 112
        %v1333 = vpop.permute.xlu0 %1332
        %1334 = vrot.lane.b32.xlu0 %v710, 112
        %v1335 = vpop.permute.xlu0 %1334
        %1336 = vrot.lane.b32.xlu0 %v711, 112
        %v1337 = vpop.permute.xlu0 %1336
        %1338 = vrot.lane.b32.xlu0 %v712, 112
        %v1339 = vpop.permute.xlu0 %1338
        %1340 = vrot.lane.b32.xlu0 %v713, 112
        %v1341 = vpop.permute.xlu0 %1340
        %1342 = vrot.lane.b32.xlu0 %v714, 112
        %v1343 = vpop.permute.xlu0 %1342
        %1344 = vrot.lane.b32.xlu0 %v715, 112
        %v1345 = vpop.permute.xlu0 %1344
        %1346 = vrot.lane.b32.xlu0 %v716, 112
        %v1347 = vpop.permute.xlu0 %1346
        %v1349 = vsel %vm717, %v1333, 0
        %v1352 = vsel %vm717, %v1335, 0
        %v1355 = vsel %vm717, %v1337, 0
        %v1358 = vsel %vm717, %v1339, 0
        %v1361 = vsel %vm717, %v1341, 0
        %v1364 = vsel %vm717, %v1343, 0
        %v1367 = vsel %vm717, %v1345, 0
        %v1370 = vsel %vm717, %v1347, 0
        %1372 = vmatprep.subr.bf16.mxu0 0
        %1373 = vmatpush1.bf16.xpose.msra.mxu0 %v1361
        %1374 = vmatprep.subr.bf16.mxu0 0
        %1375 = vmatpush1.bf16.xpose.msra.mxu0 %v1364
        %1376 = vmatprep.subr.bf16.mxu0 0
        %1377 = vmatpush1.bf16.xpose.msra.mxu0 %v1367
        %1378 = vmatprep.subr.bf16.mxu0 0
        %1379 = vmatpush1.bf16.xpose.msra.mxu0 %v1370
        %1380 = vmatprep.subr.bf16.mxu0 0
        %1381 = vmatpush1.bf16.xpose.msra.mxu0 0
        %1382 = vmatprep.subr.bf16.mxu0 0
        %1383 = vmatpush1.bf16.xpose.msra.mxu0 0
        %1384 = vmatprep.subr.bf16.mxu0 0
        %1385 = vmatpush1.bf16.xpose.msra.mxu0 0
        %1386 = vmatprep.subr.bf16.mxu0 0
        %1387 = vmatpush1.bf16.xpose.msra.mxu0 0
        %1388 = vmatprep.subr.bf16.mxu0 0
        %1389 = vmatpush1.bf16.xpose.msra.mxu0 0
        %1390 = vmatprep.subr.bf16.mxu0 0
        %1391 = vmatpush1.bf16.xpose.msra.mxu0 0
        %1392 = vmatprep.subr.bf16.mxu0 0
        %1393 = vmatpush1.bf16.xpose.msra.mxu0 0
        %1394 = vmatprep.subr.bf16.mxu0 0
        %1395 = vmatpush1.bf16.xpose.msra.mxu0 0
        %1396 = vmatprep.subr.bf16.mxu0 0
        %1397 = vmatpush1.bf16.xpose.msra.mxu0 0
        %1398 = vmatprep.subr.bf16.mxu0 0
        %1399 = vmatpush1.bf16.xpose.msra.mxu0 0
        %1400 = vmatprep.subr.bf16.mxu0 0
        %1401 = vmatpush1.bf16.xpose.msra.mxu0 0
        %1402 = vmatprep.subr.bf16.mxu0 0
        %1403 = vmatpush1.bf16.xpose.msra.mxu0 0
        %1404 = vmatprep.mubr.bf16.mxu0 0
        %1405 = vmatmul.mubr.bf16.gmra.mrb[0].mxu0 %v1349
        %v1406 = vpop.f32.mrb[0].mxu0
        %v1407 = vadd.f32 0.0, %v1406
        %v1408 = vpop.f32.mrb[0].mxu0
        %v1409 = vpop.f32.mrb[0].mxu0
        %v1410 = vadd.f32 0.0, %v1409
        %v1411 = vpop.f32.mrb[0].mxu0
        %1412 = vmatprep.mubr.bf16.mxu0 0
        %1413 = vmatmul.mubr.bf16.gmra.mrb[0].mxu0 %v1352
        %v1414 = vpop.f32.mrb[0].mxu0
        %v1415 = vadd.f32 0.0, %v1414
        %v1416 = vpop.f32.mrb[0].mxu0
        %v1417 = vpop.f32.mrb[0].mxu0
        %v1418 = vadd.f32 0.0, %v1417
        %v1419 = vpop.f32.mrb[0].mxu0
        %1420 = vmatprep.mubr.bf16.mxu0 0
        %1421 = vmatmul.mubr.bf16.gmra.mrb[0].mxu0 %v1355
        %v1422 = vpop.f32.mrb[0].mxu0
        %v1423 = vadd.f32 0.0, %v1422
        %v1424 = vpop.f32.mrb[0].mxu0
        %v1425 = vpop.f32.mrb[0].mxu0
        %v1426 = vadd.f32 0.0, %v1425
        %v1427 = vpop.f32.mrb[0].mxu0
        %1428 = vmatprep.mubr.bf16.mxu0 0
        %1429 = vmatmul.mubr.bf16.gmra.mrb[0].mxu0 %v1358
        %v1430 = vpop.f32.mrb[0].mxu0
        %v1431 = vadd.f32 0.0, %v1430
        %v1432 = vpop.f32.mrb[0].mxu0
        %v1433 = vpop.f32.mrb[0].mxu0
        %v1434 = vadd.f32 0.0, %v1433
        %v1435 = vpop.f32.mrb[0].mxu0
        %1436 = vdwg.mxu0
        %v1437 = vsel %vm807, %v1407, -inf
        %1438 = vmax.xlane.f32.xlu0 %v1437
        %v1439 = vpop.xlane.xlu0 %1438
        %v1440 = vsel %vm807, %v1410, -inf
        %1441 = vmax.xlane.f32.xlu0 %v1440
        %v1442 = vpop.xlane.xlu0 %1441
        %v1443 = vsel %vm807, %v1415, -inf
        %1444 = vmax.xlane.f32.xlu0 %v1443
        %v1445 = vpop.xlane.xlu0 %1444
        %v1446 = vsel %vm807, %v1418, -inf
        %1447 = vmax.xlane.f32.xlu0 %v1446
        %v1448 = vpop.xlane.xlu0 %1447
        %v1449 = vsel %vm807, %v1423, -inf
        %1450 = vmax.xlane.f32.xlu0 %v1449
        %v1451 = vpop.xlane.xlu0 %1450
        %v1452 = vsel %vm807, %v1426, -inf
        %1453 = vmax.xlane.f32.xlu0 %v1452
        %v1454 = vpop.xlane.xlu0 %1453
        %v1455 = vsel %vm807, %v1431, -inf
        %1456 = vmax.xlane.f32.xlu0 %v1455
        %v1457 = vpop.xlane.xlu0 %1456
        %v1458 = vsel %vm807, %v1434, -inf
        %1459 = vmax.xlane.f32.xlu0 %v1458
        %v1460 = vpop.xlane.xlu0 %1459
        %v1461 = vsub.f32 %v1407, %v1439
        %v1462 = vsub.f32 %v1410, %v1442
        %v1463 = vsub.f32 %v1415, %v1445
        %v1464 = vsub.f32 %v1418, %v1448
        %v1465 = vsub.f32 %v1423, %v1451
        %v1466 = vsub.f32 %v1426, %v1454
        %v1467 = vsub.f32 %v1431, %v1457
        %v1468 = vsub.f32 %v1434, %v1460
        %v1469 = vmul.f32 %v1461, 1.442695
        %v1470 = vpow.pop %v1469
        %v1471 = vmul.f32 %v1462, 1.442695
        %v1472 = vpow.pop %v1471
        %v1473 = vmul.f32 %v1463, 1.442695
        %v1474 = vpow.pop %v1473
        %v1475 = vmul.f32 %v1464, 1.442695
        %v1476 = vpow.pop %v1475
        %v1477 = vmul.f32 %v1465, 1.442695
        %v1478 = vpow.pop %v1477
        %v1479 = vmul.f32 %v1466, 1.442695
        %v1480 = vpow.pop %v1479
        %v1481 = vmul.f32 %v1467, 1.442695
        %v1482 = vpow.pop %v1481
        %v1483 = vmul.f32 %v1468, 1.442695
        %v1484 = vpow.pop %v1483
        %v1485 = vsel %vm807, %v1470, 0.0
        %1486 = vadd.xlane.f32.xlu0 %v1485
        %v1487 = vpop.xlane.xlu0 %1486
        %v1488 = vsel %vm807, %v1472, 0.0
        %1489 = vadd.xlane.f32.xlu0 %v1488
        %v1490 = vpop.xlane.xlu0 %1489
        %v1491 = vsel %vm807, %v1474, 0.0
        %1492 = vadd.xlane.f32.xlu0 %v1491
        %v1493 = vpop.xlane.xlu0 %1492
        %v1494 = vsel %vm807, %v1476, 0.0
        %1495 = vadd.xlane.f32.xlu0 %v1494
        %v1496 = vpop.xlane.xlu0 %1495
        %v1497 = vsel %vm807, %v1478, 0.0
        %1498 = vadd.xlane.f32.xlu0 %v1497
        %v1499 = vpop.xlane.xlu0 %1498
        %v1500 = vsel %vm807, %v1480, 0.0
        %1501 = vadd.xlane.f32.xlu0 %v1500
        %v1502 = vpop.xlane.xlu0 %1501
        %v1503 = vsel %vm807, %v1482, 0.0
        %1504 = vadd.xlane.f32.xlu0 %v1503
        %v1505 = vpop.xlane.xlu0 %1504
        %v1506 = vsel %vm807, %v1484, 0.0
        %1507 = vadd.xlane.f32.xlu0 %v1506
        %v1508 = vpop.xlane.xlu0 %1507
        %v1509 = vrcp.pop %v1487
        %v1510 = vrcp.pop %v1490
        %v1511 = vrcp.pop %v1493
        %v1512 = vrcp.pop %v1496
        %v1513 = vrcp.pop %v1499
        %v1514 = vrcp.pop %v1502
        %v1515 = vrcp.pop %v1505
        %v1516 = vrcp.pop %v1508
        %v1517 = vmul.f32 %v1470, %v1509
        %v1518 = vmul.f32 %v1472, %v1510
        %v1519 = vmul.f32 %v1474, %v1511
        %v1520 = vmul.f32 %v1476, %v1512
        %v1521 = vmul.f32 %v1478, %v1513
        %v1522 = vmul.f32 %v1480, %v1514
        %v1523 = vmul.f32 %v1482, %v1515
        %v1524 = vmul.f32 %v1484, %v1516
        %v1525 = vpack.c.bf16 %v1518, %v1517
        %v1526 = vpack.c.bf16 %v1520, %v1519
        %v1527 = vpack.c.bf16 %v1522, %v1521
        %v1528 = vpack.c.bf16 %v1524, %v1523
        %1529 = vrot.lane.b32.xlu0 %v713, 80
        %v1530 = vpop.permute.xlu0 %1529
        %1531 = vrot.lane.b32.xlu0 %v714, 80
        %v1532 = vpop.permute.xlu0 %1531
        %1533 = vrot.lane.b32.xlu0 %v715, 80
        %v1534 = vpop.permute.xlu0 %1533
        %1535 = vrot.lane.b32.xlu0 %v716, 80
        %v1536 = vpop.permute.xlu0 %1535
        %v1542 = vsel %vm807, %v1525, 0
        %v1545 = vsel %vm807, %v1526, 0
        %v1548 = vsel %vm807, %v1527, 0
        %v1551 = vsel %vm807, %v1528, 0
        %1553 = vmatprep.subr.bf16.mxu0 0
        %1554 = vmatpush1.bf16.msra.mxu0 %v1530
        %1555 = vmatprep.subr.bf16.mxu0 0
        %1556 = vmatpush1.bf16.msra.mxu0 %v1532
        %1557 = vmatprep.subr.bf16.mxu0 0
        %1558 = vmatpush1.bf16.msra.mxu0 %v1534
        %1559 = vmatprep.subr.bf16.mxu0 0
        %1560 = vmatpush1.bf16.msra.mxu0 %v1536
        %1561 = vmatprep.subr.bf16.mxu0 0
        %1562 = vmatpush1.bf16.msra.mxu0 0
        %1563 = vmatprep.subr.bf16.mxu0 0
        %1564 = vmatpush1.bf16.msra.mxu0 0
        %1565 = vmatprep.subr.bf16.mxu0 0
        %1566 = vmatpush1.bf16.msra.mxu0 0
        %1567 = vmatprep.subr.bf16.mxu0 0
        %1568 = vmatpush1.bf16.msra.mxu0 0
        %1569 = vmatprep.subr.bf16.mxu0 0
        %1570 = vmatpush1.bf16.msra.mxu0 0
        %1571 = vmatprep.subr.bf16.mxu0 0
        %1572 = vmatpush1.bf16.msra.mxu0 0
        %1573 = vmatprep.subr.bf16.mxu0 0
        %1574 = vmatpush1.bf16.msra.mxu0 0
        %1575 = vmatprep.subr.bf16.mxu0 0
        %1576 = vmatpush1.bf16.msra.mxu0 0
        %1577 = vmatprep.subr.bf16.mxu0 0
        %1578 = vmatpush1.bf16.msra.mxu0 0
        %1579 = vmatprep.subr.bf16.mxu0 0
        %1580 = vmatpush1.bf16.msra.mxu0 0
        %1581 = vmatprep.subr.bf16.mxu0 0
        %1582 = vmatpush1.bf16.msra.mxu0 0
        %1583 = vmatprep.subr.bf16.mxu0 0
        %1584 = vmatpush1.bf16.msra.mxu0 0
        %1585 = vmatprep.mubr.bf16.mxu0 0
        %1586 = vmatmul.mubr.bf16.gmra.mrb[0].mxu0 %v1542
        %v1587 = vpop.f32.mrb[0].mxu0
        %v1588 = vadd.f32 0.0, %v1587
        %v1589 = vpop.f32.mrb[0].mxu0
        %v1590 = vpop.f32.mrb[0].mxu0
        %v1591 = vadd.f32 0.0, %v1590
        %v1592 = vpop.f32.mrb[0].mxu0
        %1593 = vmatprep.mubr.bf16.mxu0 0
        %1594 = vmatmul.mubr.bf16.gmra.mrb[0].mxu0 %v1545
        %v1595 = vpop.f32.mrb[0].mxu0
        %v1596 = vadd.f32 0.0, %v1595
        %v1597 = vpop.f32.mrb[0].mxu0
        %v1598 = vpop.f32.mrb[0].mxu0
        %v1599 = vadd.f32 0.0, %v1598
        %v1600 = vpop.f32.mrb[0].mxu0
        %1601 = vmatprep.mubr.bf16.mxu0 0
        %1602 = vmatmul.mubr.bf16.gmra.mrb[0].mxu0 %v1548
        %v1603 = vpop.f32.mrb[0].mxu0
        %v1604 = vadd.f32 0.0, %v1603
        %v1605 = vpop.f32.mrb[0].mxu0
        %v1606 = vpop.f32.mrb[0].mxu0
        %v1607 = vadd.f32 0.0, %v1606
        %v1608 = vpop.f32.mrb[0].mxu0
        %1609 = vmatprep.mubr.bf16.mxu0 0
        %1610 = vmatmul.mubr.bf16.gmra.mrb[0].mxu0 %v1551
        %v1611 = vpop.f32.mrb[0].mxu0
        %v1612 = vadd.f32 0.0, %v1611
        %v1613 = vpop.f32.mrb[0].mxu0
        %v1614 = vpop.f32.mrb[0].mxu0
        %v1615 = vadd.f32 0.0, %v1614
        %v1616 = vpop.f32.mrb[0].mxu0
        %1617 = vdwg.mxu0
        %1626 = vrot.lane.b32.xlu0 %v1588, 16
        %v1627 = vpop.permute.xlu0 %1626
        %1628 = vrot.lane.b32.xlu0 %v1591, 16
        %v1629 = vpop.permute.xlu0 %1628
        %1630 = vrot.lane.b32.xlu0 %v1596, 16
        %v1631 = vpop.permute.xlu0 %1630
        %1632 = vrot.lane.b32.xlu0 %v1599, 16
        %v1633 = vpop.permute.xlu0 %1632
        %1634 = vrot.lane.b32.xlu0 %v1604, 16
        %v1635 = vpop.permute.xlu0 %1634
        %1636 = vrot.lane.b32.xlu0 %v1607, 16
        %v1637 = vpop.permute.xlu0 %1636
        %1638 = vrot.lane.b32.xlu0 %v1612, 16
        %v1639 = vpop.permute.xlu0 %1638
        %1640 = vrot.lane.b32.xlu0 %v1615, 16
        %v1641 = vpop.permute.xlu0 %1640
        %vm1650 = vcmask 195712
        %1651 = vst.msk [vmem:[#allocation2] sm:$0xff] %vm1650, %v1627
        %1652 = vst.msk [vmem:[#allocation2 + $0x8] sm:$0xff] %vm1650, %v1629
        %1653 = vst.msk [vmem:[#allocation2 + $0x10] sm:$0xff] %vm1650, %v1631
        %1654 = vst.msk [vmem:[#allocation2 + $0x18] sm:$0xff] %vm1650, %v1633
        %1655 = vst.msk [vmem:[#allocation2 + $0x20] sm:$0xff] %vm1650, %v1635
        %1656 = vst.msk [vmem:[#allocation2 + $0x28] sm:$0xff] %vm1650, %v1637
        %1657 = vst.msk [vmem:[#allocation2 + $0x30] sm:$0xff] %vm1650, %v1639
        %1658 = vst.msk [vmem:[#allocation2 + $0x38] sm:$0xff] %vm1650, %v1641
        %1659 = vrot.lane.b32.xlu0 %v709, 104
        %v1660 = vpop.permute.xlu0 %1659
        %1661 = vrot.lane.b32.xlu0 %v710, 104
        %v1662 = vpop.permute.xlu0 %1661
        %1663 = vrot.lane.b32.xlu0 %v711, 104
        %v1664 = vpop.permute.xlu0 %1663
        %1665 = vrot.lane.b32.xlu0 %v712, 104
        %v1666 = vpop.permute.xlu0 %1665
        %1667 = vrot.lane.b32.xlu0 %v713, 104
        %v1668 = vpop.permute.xlu0 %1667
        %1669 = vrot.lane.b32.xlu0 %v714, 104
        %v1670 = vpop.permute.xlu0 %1669
        %1671 = vrot.lane.b32.xlu0 %v715, 104
        %v1672 = vpop.permute.xlu0 %1671
        %1673 = vrot.lane.b32.xlu0 %v716, 104
        %v1674 = vpop.permute.xlu0 %1673
        %v1676 = vsel %vm717, %v1660, 0
        %v1679 = vsel %vm717, %v1662, 0
        %v1682 = vsel %vm717, %v1664, 0
        %v1685 = vsel %vm717, %v1666, 0
        %v1688 = vsel %vm717, %v1668, 0
        %v1691 = vsel %vm717, %v1670, 0
        %v1694 = vsel %vm717, %v1672, 0
        %v1697 = vsel %vm717, %v1674, 0
        %1699 = vmatprep.subr.bf16.mxu0 0
        %1700 = vmatpush1.bf16.xpose.msra.mxu0 %v1688
        %1701 = vmatprep.subr.bf16.mxu0 0
        %1702 = vmatpush1.bf16.xpose.msra.mxu0 %v1691
        %1703 = vmatprep.subr.bf16.mxu0 0
        %1704 = vmatpush1.bf16.xpose.msra.mxu0 %v1694
        %1705 = vmatprep.subr.bf16.mxu0 0
        %1706 = vmatpush1.bf16.xpose.msra.mxu0 %v1697
        %1707 = vmatprep.subr.bf16.mxu0 0
        %1708 = vmatpush1.bf16.xpose.msra.mxu0 0
        %1709 = vmatprep.subr.bf16.mxu0 0
        %1710 = vmatpush1.bf16.xpose.msra.mxu0 0
        %1711 = vmatprep.subr.bf16.mxu0 0
        %1712 = vmatpush1.bf16.xpose.msra.mxu0 0
        %1713 = vmatprep.subr.bf16.mxu0 0
        %1714 = vmatpush1.bf16.xpose.msra.mxu0 0
        %1715 = vmatprep.subr.bf16.mxu0 0
        %1716 = vmatpush1.bf16.xpose.msra.mxu0 0
        %1717 = vmatprep.subr.bf16.mxu0 0
        %1718 = vmatpush1.bf16.xpose.msra.mxu0 0
        %1719 = vmatprep.subr.bf16.mxu0 0
        %1720 = vmatpush1.bf16.xpose.msra.mxu0 0
        %1721 = vmatprep.subr.bf16.mxu0 0
        %1722 = vmatpush1.bf16.xpose.msra.mxu0 0
        %1723 = vmatprep.subr.bf16.mxu0 0
        %1724 = vmatpush1.bf16.xpose.msra.mxu0 0
        %1725 = vmatprep.subr.bf16.mxu0 0
        %1726 = vmatpush1.bf16.xpose.msra.mxu0 0
        %1727 = vmatprep.subr.bf16.mxu0 0
        %1728 = vmatpush1.bf16.xpose.msra.mxu0 0
        %1729 = vmatprep.subr.bf16.mxu0 0
        %1730 = vmatpush1.bf16.xpose.msra.mxu0 0
        %1731 = vmatprep.mubr.bf16.mxu0 0
        %1732 = vmatmul.mubr.bf16.gmra.mrb[0].mxu0 %v1676
        %v1733 = vpop.f32.mrb[0].mxu0
        %v1734 = vadd.f32 0.0, %v1733
        %v1735 = vpop.f32.mrb[0].mxu0
        %v1736 = vpop.f32.mrb[0].mxu0
        %v1737 = vadd.f32 0.0, %v1736
        %v1738 = vpop.f32.mrb[0].mxu0
        %1739 = vmatprep.mubr.bf16.mxu0 0
        %1740 = vmatmul.mubr.bf16.gmra.mrb[0].mxu0 %v1679
        %v1741 = vpop.f32.mrb[0].mxu0
        %v1742 = vadd.f32 0.0, %v1741
        %v1743 = vpop.f32.mrb[0].mxu0
        %v1744 = vpop.f32.mrb[0].mxu0
        %v1745 = vadd.f32 0.0, %v1744
        %v1746 = vpop.f32.mrb[0].mxu0
        %1747 = vmatprep.mubr.bf16.mxu0 0
        %1748 = vmatmul.mubr.bf16.gmra.mrb[0].mxu0 %v1682
        %v1749 = vpop.f32.mrb[0].mxu0
        %v1750 = vadd.f32 0.0, %v1749
        %v1751 = vpop.f32.mrb[0].mxu0
        %v1752 = vpop.f32.mrb[0].mxu0
        %v1753 = vadd.f32 0.0, %v1752
        %v1754 = vpop.f32.mrb[0].mxu0
        %1755 = vmatprep.mubr.bf16.mxu0 0
        %1756 = vmatmul.mubr.bf16.gmra.mrb[0].mxu0 %v1685
        %v1757 = vpop.f32.mrb[0].mxu0
        %v1758 = vadd.f32 0.0, %v1757
        %v1759 = vpop.f32.mrb[0].mxu0
        %v1760 = vpop.f32.mrb[0].mxu0
        %v1761 = vadd.f32 0.0, %v1760
        %v1762 = vpop.f32.mrb[0].mxu0
        %1763 = vdwg.mxu0
        %v1764 = vsel %vm807, %v1734, -inf
        %1765 = vmax.xlane.f32.xlu0 %v1764
        %v1766 = vpop.xlane.xlu0 %1765
        %v1767 = vsel %vm807, %v1737, -inf
        %1768 = vmax.xlane.f32.xlu0 %v1767
        %v1769 = vpop.xlane.xlu0 %1768
        %v1770 = vsel %vm807, %v1742, -inf
        %1771 = vmax.xlane.f32.xlu0 %v1770
        %v1772 = vpop.xlane.xlu0 %1771
        %v1773 = vsel %vm807, %v1745, -inf
        %1774 = vmax.xlane.f32.xlu0 %v1773
        %v1775 = vpop.xlane.xlu0 %1774
        %v1776 = vsel %vm807, %v1750, -inf
        %1777 = vmax.xlane.f32.xlu0 %v1776
        %v1778 = vpop.xlane.xlu0 %1777
        %v1779 = vsel %vm807, %v1753, -inf
        %1780 = vmax.xlane.f32.xlu0 %v1779
        %v1781 = vpop.xlane.xlu0 %1780
        %v1782 = vsel %vm807, %v1758, -inf
        %1783 = vmax.xlane.f32.xlu0 %v1782
        %v1784 = vpop.xlane.xlu0 %1783
        %v1785 = vsel %vm807, %v1761, -inf
        %1786 = vmax.xlane.f32.xlu0 %v1785
        %v1787 = vpop.xlane.xlu0 %1786
        %v1788 = vsub.f32 %v1734, %v1766
        %v1789 = vsub.f32 %v1737, %v1769
        %v1790 = vsub.f32 %v1742, %v1772
        %v1791 = vsub.f32 %v1745, %v1775
        %v1792 = vsub.f32 %v1750, %v1778
        %v1793 = vsub.f32 %v1753, %v1781
        %v1794 = vsub.f32 %v1758, %v1784
        %v1795 = vsub.f32 %v1761, %v1787
        %v1796 = vmul.f32 %v1788, 1.442695
        %v1797 = vpow.pop %v1796
        %v1798 = vmul.f32 %v1789, 1.442695
        %v1799 = vpow.pop %v1798
        %v1800 = vmul.f32 %v1790, 1.442695
        %v1801 = vpow.pop %v1800
        %v1802 = vmul.f32 %v1791, 1.442695
        %v1803 = vpow.pop %v1802
        %v1804 = vmul.f32 %v1792, 1.442695
        %v1805 = vpow.pop %v1804
        %v1806 = vmul.f32 %v1793, 1.442695
        %v1807 = vpow.pop %v1806
        %v1808 = vmul.f32 %v1794, 1.442695
        %v1809 = vpow.pop %v1808
        %v1810 = vmul.f32 %v1795, 1.442695
        %v1811 = vpow.pop %v1810
        %v1812 = vsel %vm807, %v1797, 0.0
        %1813 = vadd.xlane.f32.xlu0 %v1812
        %v1814 = vpop.xlane.xlu0 %1813
        %v1815 = vsel %vm807, %v1799, 0.0
        %1816 = vadd.xlane.f32.xlu0 %v1815
        %v1817 = vpop.xlane.xlu0 %1816
        %v1818 = vsel %vm807, %v1801, 0.0
        %1819 = vadd.xlane.f32.xlu0 %v1818
        %v1820 = vpop.xlane.xlu0 %1819
        %v1821 = vsel %vm807, %v1803, 0.0
        %1822 = vadd.xlane.f32.xlu0 %v1821
        %v1823 = vpop.xlane.xlu0 %1822
        %v1824 = vsel %vm807, %v1805, 0.0
        %1825 = vadd.xlane.f32.xlu0 %v1824
        %v1826 = vpop.xlane.xlu0 %1825
        %v1827 = vsel %vm807, %v1807, 0.0
        %1828 = vadd.xlane.f32.xlu0 %v1827
        %v1829 = vpop.xlane.xlu0 %1828
        %v1830 = vsel %vm807, %v1809, 0.0
        %1831 = vadd.xlane.f32.xlu0 %v1830
        %v1832 = vpop.xlane.xlu0 %1831
        %v1833 = vsel %vm807, %v1811, 0.0
        %1834 = vadd.xlane.f32.xlu0 %v1833
        %v1835 = vpop.xlane.xlu0 %1834
        %v1836 = vrcp.pop %v1814
        %v1837 = vrcp.pop %v1817
        %v1838 = vrcp.pop %v1820
        %v1839 = vrcp.pop %v1823
        %v1840 = vrcp.pop %v1826
        %v1841 = vrcp.pop %v1829
        %v1842 = vrcp.pop %v1832
        %v1843 = vrcp.pop %v1835
        %v1844 = vmul.f32 %v1797, %v1836
        %v1845 = vmul.f32 %v1799, %v1837
        %v1846 = vmul.f32 %v1801, %v1838
        %v1847 = vmul.f32 %v1803, %v1839
        %v1848 = vmul.f32 %v1805, %v1840
        %v1849 = vmul.f32 %v1807, %v1841
        %v1850 = vmul.f32 %v1809, %v1842
        %v1851 = vmul.f32 %v1811, %v1843
        %v1852 = vpack.c.bf16 %v1845, %v1844
        %v1853 = vpack.c.bf16 %v1847, %v1846
        %v1854 = vpack.c.bf16 %v1849, %v1848
        %v1855 = vpack.c.bf16 %v1851, %v1850
        %1856 = vrot.lane.b32.xlu0 %v713, 72
        %v1857 = vpop.permute.xlu0 %1856
        %1858 = vrot.lane.b32.xlu0 %v714, 72
        %v1859 = vpop.permute.xlu0 %1858
        %1860 = vrot.lane.b32.xlu0 %v715, 72
        %v1861 = vpop.permute.xlu0 %1860
        %1862 = vrot.lane.b32.xlu0 %v716, 72
        %v1863 = vpop.permute.xlu0 %1862
        %v1869 = vsel %vm807, %v1852, 0
        %v1872 = vsel %vm807, %v1853, 0
        %v1875 = vsel %vm807, %v1854, 0
        %v1878 = vsel %vm807, %v1855, 0
        %1880 = vmatprep.subr.bf16.mxu0 0
        %1881 = vmatpush1.bf16.msra.mxu0 %v1857
        %1882 = vmatprep.subr.bf16.mxu0 0
        %1883 = vmatpush1.bf16.msra.mxu0 %v1859
        %1884 = vmatprep.subr.bf16.mxu0 0
        %1885 = vmatpush1.bf16.msra.mxu0 %v1861
        %1886 = vmatprep.subr.bf16.mxu0 0
        %1887 = vmatpush1.bf16.msra.mxu0 %v1863
        %1888 = vmatprep.subr.bf16.mxu0 0
        %1889 = vmatpush1.bf16.msra.mxu0 0
        %1890 = vmatprep.subr.bf16.mxu0 0
        %1891 = vmatpush1.bf16.msra.mxu0 0
        %1892 = vmatprep.subr.bf16.mxu0 0
        %1893 = vmatpush1.bf16.msra.mxu0 0
        %1894 = vmatprep.subr.bf16.mxu0 0
        %1895 = vmatpush1.bf16.msra.mxu0 0
        %1896 = vmatprep.subr.bf16.mxu0 0
        %1897 = vmatpush1.bf16.msra.mxu0 0
        %1898 = vmatprep.subr.bf16.mxu0 0
        %1899 = vmatpush1.bf16.msra.mxu0 0
        %1900 = vmatprep.subr.bf16.mxu0 0
        %1901 = vmatpush1.bf16.msra.mxu0 0
        %1902 = vmatprep.subr.bf16.mxu0 0
        %1903 = vmatpush1.bf16.msra.mxu0 0
        %1904 = vmatprep.subr.bf16.mxu0 0
        %1905 = vmatpush1.bf16.msra.mxu0 0
        %1906 = vmatprep.subr.bf16.mxu0 0
        %1907 = vmatpush1.bf16.msra.mxu0 0
        %1908 = vmatprep.subr.bf16.mxu0 0
        %1909 = vmatpush1.bf16.msra.mxu0 0
        %1910 = vmatprep.subr.bf16.mxu0 0
        %1911 = vmatpush1.bf16.msra.mxu0 0
        %1912 = vmatprep.mubr.bf16.mxu0 0
        %1913 = vmatmul.mubr.bf16.gmra.mrb[0].mxu0 %v1869
        %v1914 = vpop.f32.mrb[0].mxu0
        %v1915 = vadd.f32 0.0, %v1914
        %v1916 = vpop.f32.mrb[0].mxu0
        %v1917 = vpop.f32.mrb[0].mxu0
        %v1918 = vadd.f32 0.0, %v1917
        %v1919 = vpop.f32.mrb[0].mxu0
        %1920 = vmatprep.mubr.bf16.mxu0 0
        %1921 = vmatmul.mubr.bf16.gmra.mrb[0].mxu0 %v1872
        %v1922 = vpop.f32.mrb[0].mxu0
        %v1923 = vadd.f32 0.0, %v1922
        %v1924 = vpop.f32.mrb[0].mxu0
        %v1925 = vpop.f32.mrb[0].mxu0
        %v1926 = vadd.f32 0.0, %v1925
        %v1927 = vpop.f32.mrb[0].mxu0
        %1928 = vmatprep.mubr.bf16.mxu0 0
        %1929 = vmatmul.mubr.bf16.gmra.mrb[0].mxu0 %v1875
        %v1930 = vpop.f32.mrb[0].mxu0
        %v1931 = vadd.f32 0.0, %v1930
        %v1932 = vpop.f32.mrb[0].mxu0
        %v1933 = vpop.f32.mrb[0].mxu0
        %v1934 = vadd.f32 0.0, %v1933
        %v1935 = vpop.f32.mrb[0].mxu0
        %1936 = vmatprep.mubr.bf16.mxu0 0
        %1937 = vmatmul.mubr.bf16.gmra.mrb[0].mxu0 %v1878
        %v1938 = vpop.f32.mrb[0].mxu0
        %v1939 = vadd.f32 0.0, %v1938
        %v1940 = vpop.f32.mrb[0].mxu0
        %v1941 = vpop.f32.mrb[0].mxu0
        %v1942 = vadd.f32 0.0, %v1941
        %v1943 = vpop.f32.mrb[0].mxu0
        %1944 = vdwg.mxu0
        %1953 = vrot.lane.b32.xlu0 %v1915, 24
        %v1954 = vpop.permute.xlu0 %1953
        %1955 = vrot.lane.b32.xlu0 %v1918, 24
        %v1956 = vpop.permute.xlu0 %1955
        %1957 = vrot.lane.b32.xlu0 %v1923, 24
        %v1958 = vpop.permute.xlu0 %1957
        %1959 = vrot.lane.b32.xlu0 %v1926, 24
        %v1960 = vpop.permute.xlu0 %1959
        %1961 = vrot.lane.b32.xlu0 %v1931, 24
        %v1962 = vpop.permute.xlu0 %1961
        %1963 = vrot.lane.b32.xlu0 %v1934, 24
        %v1964 = vpop.permute.xlu0 %1963
        %1965 = vrot.lane.b32.xlu0 %v1939, 24
        %v1966 = vpop.permute.xlu0 %1965
        %1967 = vrot.lane.b32.xlu0 %v1942, 24
        %v1968 = vpop.permute.xlu0 %1967
        %vm1977 = vcmask 261312
        %1978 = vst.msk [vmem:[#allocation2] sm:$0xff] %vm1977, %v1954
        %1979 = vst.msk [vmem:[#allocation2 + $0x8] sm:$0xff] %vm1977, %v1956
        %1980 = vst.msk [vmem:[#allocation2 + $0x10] sm:$0xff] %vm1977, %v1958
        %1981 = vst.msk [vmem:[#allocation2 + $0x18] sm:$0xff] %vm1977, %v1960
        %1982 = vst.msk [vmem:[#allocation2 + $0x20] sm:$0xff] %vm1977, %v1962
        %1983 = vst.msk [vmem:[#allocation2 + $0x28] sm:$0xff] %vm1977, %v1964
        %1984 = vst.msk [vmem:[#allocation2 + $0x30] sm:$0xff] %vm1977, %v1966
        %1985 = vst.msk [vmem:[#allocation2 + $0x38] sm:$0xff] %vm1977, %v1968
        %v1986 = vld [vmem:[#allocation2] sm:$0xff]
        %v1987 = vld [vmem:[#allocation2 + $0x8] sm:$0xff]
        %v1988 = vld [vmem:[#allocation2 + $0x10] sm:$0xff]
        %v1989 = vld [vmem:[#allocation2 + $0x18] sm:$0xff]
        %v1990 = vld [vmem:[#allocation2 + $0x20] sm:$0xff]
        %v1991 = vld [vmem:[#allocation2 + $0x28] sm:$0xff]
        %v1992 = vld [vmem:[#allocation2 + $0x30] sm:$0xff]
        %v1993 = vld [vmem:[#allocation2 + $0x38] sm:$0xff]
        %v1994 = vpack.c.bf16 %v1987, %v1986
        %v1995 = vpack.c.bf16 %v1989, %v1988
        %v1996 = vpack.c.bf16 %v1991, %v1990
        %v1997 = vpack.c.bf16 %v1993, %v1992
        %v1998 = vld [vmem:[#allocation12] sm:$0xf]
        %v1999 = vld [vmem:[#allocation12 + $0x4] sm:$0xf]
        %v2000 = vld [vmem:[#allocation12 + $0x8] sm:$0xf]
        %v2001 = vld [vmem:[#allocation12 + $0xc] sm:$0xf]
        %v2002 = vld [vmem:[#allocation14] sm:$0x1]
        %v2004 = vlaneseq
        %v2005 = vshrl.u32 %v2004, 7
        %v2006 = vsub.s32 0, %v2005
        %v2007 = vrot.slane %v2002, %v2006
        %v2013 = vunpack.c.l.b16 %v1998
        %v2014 = vunpack.c.l.b16 %v1999
        %v2015 = vunpack.c.l.b16 %v2000
        %v2016 = vunpack.c.l.b16 %v2001
        %v2017 = vpack.c.b16 %v2014, %v2013
        %v2018 = vpack.c.b16 %v2016, %v2015
        %v2022 = vsel %vm389, %v1994, 0
        %v2025 = vsel %vm389, %v1995, 0
        %v2028 = vsel %vm389, %v1996, 0
        %v2031 = vsel %vm389, %v1997, 0
        %2033 = vmatprep.subr.bf16.mxu0 0
        %2034 = vmatpush1.bf16.msra.mxu0 %v2017
        %2035 = vmatprep.subr.bf16.mxu0 0
        %2036 = vmatpush1.bf16.msra.mxu0 %v2018
        %2037 = vmatprep.subr.bf16.mxu0 0
        %2038 = vmatpush1.bf16.msra.mxu0 0
        %2039 = vmatprep.subr.bf16.mxu0 0
        %2040 = vmatpush1.bf16.msra.mxu0 0
        %2041 = vmatprep.subr.bf16.mxu0 0
        %2042 = vmatpush1.bf16.msra.mxu0 0
        %2043 = vmatprep.subr.bf16.mxu0 0
        %2044 = vmatpush1.bf16.msra.mxu0 0
        %2045 = vmatprep.subr.bf16.mxu0 0
        %2046 = vmatpush1.bf16.msra.mxu0 0
        %2047 = vmatprep.subr.bf16.mxu0 0
        %2048 = vmatpush1.bf16.msra.mxu0 0
        %2049 = vmatprep.subr.bf16.mxu0 0
        %2050 = vmatpush1.bf16.msra.mxu0 0
        %2051 = vmatprep.subr.bf16.mxu0 0
        %2052 = vmatpush1.bf16.msra.mxu0 0
        %2053 = vmatprep.subr.bf16.mxu0 0
        %2054 = vmatpush1.bf16.msra.mxu0 0
        %2055 = vmatprep.subr.bf16.mxu0 0
        %2056 = vmatpush1.bf16.msra.mxu0 0
        %2057 = vmatprep.subr.bf16.mxu0 0
        %2058 = vmatpush1.bf16.msra.mxu0 0
        %2059 = vmatprep.subr.bf16.mxu0 0
        %2060 = vmatpush1.bf16.msra.mxu0 0
        %2061 = vmatprep.subr.bf16.mxu0 0
        %2062 = vmatpush1.bf16.msra.mxu0 0
        %2063 = vmatprep.subr.bf16.mxu0 0
        %2064 = vmatpush1.bf16.msra.mxu0 0
        %2065 = vmatprep.mubr.bf16.mxu0 0
        %2066 = vmatmul.mubr.bf16.gmra.mrb[0].mxu0 %v2022
        %v2067 = vpop.f32.mrb[0].mxu0
        %v2068 = vadd.f32 %v2007, %v2067
        %v2069 = vpop.f32.mrb[0].mxu0
        %v2070 = vpop.f32.mrb[0].mxu0
        %v2071 = vadd.f32 %v2007, %v2070
        %v2072 = vpop.f32.mrb[0].mxu0
        %2073 = vmatprep.mubr.bf16.mxu0 0
        %2074 = vmatmul.mubr.bf16.gmra.mrb[0].mxu0 %v2025
        %v2075 = vpop.f32.mrb[0].mxu0
        %v2076 = vadd.f32 %v2007, %v2075
        %v2077 = vpop.f32.mrb[0].mxu0
        %v2078 = vpop.f32.mrb[0].mxu0
        %v2079 = vadd.f32 %v2007, %v2078
        %v2080 = vpop.f32.mrb[0].mxu0
        %2081 = vmatprep.mubr.bf16.mxu0 0
        %2082 = vmatmul.mubr.bf16.gmra.mrb[0].mxu0 %v2028
        %v2083 = vpop.f32.mrb[0].mxu0
        %v2084 = vadd.f32 %v2007, %v2083
        %v2085 = vpop.f32.mrb[0].mxu0
        %v2086 = vpop.f32.mrb[0].mxu0
        %v2087 = vadd.f32 %v2007, %v2086
        %v2088 = vpop.f32.mrb[0].mxu0
        %2089 = vmatprep.mubr.bf16.mxu0 0
        %2090 = vmatmul.mubr.bf16.gmra.mrb[0].mxu0 %v2031
        %v2091 = vpop.f32.mrb[0].mxu0
        %v2092 = vadd.f32 %v2007, %v2091
        %v2093 = vpop.f32.mrb[0].mxu0
        %v2094 = vpop.f32.mrb[0].mxu0
        %v2095 = vadd.f32 %v2007, %v2094
        %v2096 = vpop.f32.mrb[0].mxu0
        %2097 = vdwg.mxu0
        %v2098 = vadd.f32 %v379, %v2068
        %v2099 = vadd.f32 %v380, %v2071
        %v2100 = vadd.f32 %v381, %v2076
        %v2101 = vadd.f32 %v382, %v2079
        %v2102 = vadd.f32 %v383, %v2084
        %v2103 = vadd.f32 %v384, %v2087
        %v2104 = vadd.f32 %v385, %v2092
        %v2105 = vadd.f32 %v386, %v2095
        %2106 = vst.msk [vmem:[%s377] sm:$0xff] %vm389, %v2098
        %2107 = vst.msk [vmem:[%s377 + $0x8] sm:$0xff] %vm389, %v2099
        %2108 = vst.msk [vmem:[%s377 + $0x10] sm:$0xff] %vm389, %v2100
        %2109 = vst.msk [vmem:[%s377 + $0x18] sm:$0xff] %vm389, %v2101
        %2110 = vst.msk [vmem:[%s377 + $0x20] sm:$0xff] %vm389, %v2102
        %2111 = vst.msk [vmem:[%s377 + $0x28] sm:$0xff] %vm389, %v2103
        %2112 = vst.msk [vmem:[%s377 + $0x30] sm:$0xff] %vm389, %v2104
        %2113 = vst.msk [vmem:[%s377 + $0x38] sm:$0xff] %vm389, %v2105
        %s2114 = sand.u32 %s187, 1
        %s2115 = scalar_lea.sflag [#allocation5], %s2114
        %s2116 = sand.u32 %s187, 1
        %s2117 = smul.addr %s2116, 64
        %s2118 = scalar_lea.vmem [#allocation15], %s2117
        // Predicated region
        $region77: #{tpu_custom_call.1} parent=47 // pred_check
          %p2119 = pneg %p197
        $region78: #{tpu_custom_call.1} parent=47 // pred_check_branch
          %2121 = sbr.rel (%p2119) target = $region80
        $region79: #{tpu_custom_call.1} parent=47 // pred_region
          %s2123 = ssub.s32 1024, 1024
          %2124 = vsyncadd %s2115, %s2123
          %s2125 = smul.addr %s27, 8
          %s2126 = smul.addr %s2125, 128
          %s2127 = scalar_lea.hbm %s7, %s2126
          %s2128 = sshll.u32 %s2118, 4
          %s2129 = int_to_ptr.vmem [resolvable:$true] %s2128
          %2134 = dma.vmem_to_hbm [thread:$0]  %s2129, 1024, %s2127, %s2115, 128, 128, 8
        $region80: #{tpu_custom_call.1} parent=47 // pred_fallthru
          _
      $region48: #{tpu_custom_call.1} parent=5 // pred_fallthru
        _
      %p2135 = scmp.le.s32.totalorder 2, %s22
      // Predicated region
      $region81: #{tpu_custom_call.1} parent=5 // pred_check
        %p2136 = pneg %p2135
      $region82: #{tpu_custom_call.1} parent=5 // pred_check_branch
        %2138 = sbr.rel (%p2136) target = $region84
      $region83: #{tpu_custom_call.1} parent=5 // pred_region
        %s2139 = ssub.s32 %s22, 2
        // Predicated region
        $region85: #{tpu_custom_call.1} parent=83 // pred_check
          %p2140 = pneg %p203
        $region86: #{tpu_custom_call.1} parent=83 // pred_check_branch
          %2142 = sbr.rel (%p2140) target = $region88
        $region87: #{tpu_custom_call.1} parent=83 // pred_region
          %s2143 = sand.u32 %s188, 1
          %s2144 = scalar_lea.sflag [#allocation5], %s2143
          %s2145 = sand.u32 %s188, 1
          %s2146 = smul.addr %s2145, 64
          %s2147 = scalar_lea.vmem [#allocation15], %s2146
          %2148 = dma.done %s2144, 1024
        $region88: #{tpu_custom_call.1} parent=83 // pred_fallthru
          _
      $region84: #{tpu_custom_call.1} parent=5 // pred_fallthru
        _
    $region6: #{tpu_custom_call.1} parent=1 // loop_footer
      %s26 = sadd.s32 1, %s22
    $region7: #{tpu_custom_call.1} parent=1 // loop_footer_branch
      %21 = sbr.rel target = $region3
    $region8: #{tpu_custom_call.1} parent=1 // loop_exit
      _
    %2149 = vsyncpa [#allocation4], 1
    %s2150 = scalar_lea.sflag [#allocation4], 1
    %2151 = vsyncpa %s2150, 1
    %2152 = vsyncpa [#allocation7], 1
    %2153 = vsyncpa [#allocation10], 1
    %2154 = vsyncpa [#allocation13], 1
    %2155 = vsyncpa [#allocation5], 1
    %s2156 = scalar_lea.sflag [#allocation5], 1
    %2157 = vsyncpa %s2156, 1

</llo_original>
